<compile_context>
chip_gen: v6e
topology: v6e:2x2x1
jax: 0.10.0
libtpu: 0.0.40
codegen_flags: <defaults>
</compile_context>

<pallas_src>
import math
from functools import partial

import numpy as np
import jax
import jax.numpy as jnp
from jax.experimental import pallas as pl
from jax.experimental.pallas import tpu as pltpu


def _build_conv_toeplitz(w, H, W):
    """Unfold a (1, 2, K, K) SAME-padded conv into T of shape (2, H*W, H*W):
    conv(cat([m, a]))[q] == m_flat @ T[0, :, q] + a_flat @ T[1, :, q]."""
    K = w.shape[-1]
    pad = K // 2
    HW = H * W
    wn = np.asarray(w, dtype=np.float32).reshape(2, K, K)
    T = np.zeros((2, HW, HW), dtype=np.float32)
    oy = np.arange(H)[:, None]                      # (H, 1)
    ox = np.arange(W)[None, :]                      # (1, W)
    q = np.broadcast_to(oy * W + ox, (H, W))        # output pixel index
    for dy in range(K):
        for dx in range(K):
            iy = oy + dy - pad
            ix = ox + dx - pad
            valid = (iy >= 0) & (iy < H) & (ix >= 0) & (ix < W)     # (H, W)
            p = np.broadcast_to(iy * W + ix, (H, W))
            p_idx = p[valid]
            q_idx = q[valid]
            T[0, p_idx, q_idx] = wn[0, dy, dx]
            T[1, p_idx, q_idx] = wn[1, dy, dx]
    return jnp.asarray(T)


def _spatial_attention_kernel(x_ref, t_ref, b_ref, o_ref, *, C, c_chunk):
    """One grid step: (bt, C, HW) lane-dense block -> (bt, 1, HW) gate."""
    bt = x_ref.shape[0]
    HW = x_ref.shape[-1]

    # --- channel pooling, chunked: no full-block f32 copy, small live set ---
    cs0 = min(c_chunk, C)
    chunk = x_ref[:, 0:cs0, :]                               # (bt, cs, HW) input dtype
    max_map = jnp.max(chunk, axis=1)                         # (bt, HW) input dtype
    sum_map = jnp.sum(chunk.astype(jnp.float32), axis=1)     # (bt, HW) f32
    for c0 in range(c_chunk, C, c_chunk):
        cs = min(c_chunk, C - c0)
        chunk = x_ref[:, c0:c0 + cs, :]
        max_map = jnp.maximum(max_map, jnp.max(chunk, axis=1))
        sum_map = sum_map + jnp.sum(chunk.astype(jnp.float32), axis=1)
    avg_map = sum_map * (1.0 / C)                            # (bt, HW) f32

    # --- 7x7 SAME conv as two MXU matmuls against the Toeplitz weights ---
    conv = jnp.dot(max_map.astype(jnp.float32), t_ref[0],
                   preferred_element_type=jnp.float32,
                   precision=jax.lax.Precision.HIGHEST)
    conv = conv + jnp.dot(avg_map, t_ref[1],
                          preferred_element_type=jnp.float32,
                          precision=jax.lax.Precision.HIGHEST)

    # --- bias + sigmoid + store, all lane-dense on (bt, HW) ---
    gate = jax.nn.sigmoid(conv + b_ref[0])
    o_ref[...] = gate.reshape(bt, 1, HW).astype(o_ref.dtype)


def _pick_batch_tile(batch, bytes_per_image_2buf, budget_bytes):
    """Largest divisor of `batch` whose double-buffered block fits the budget,
    preferring >= 4 grid steps (2 per TC on v7x), then >= 2."""
    divisors = [d for d in range(1, batch + 1) if batch % d == 0]
    fitting = [d for d in divisors if d * bytes_per_image_2buf <= budget_bytes]
    if not fitting:
        return 1
    for min_steps in (4, 2):
        cands = [d for d in fitting if batch // d >= min_steps]
        if cands:
            return max(cands)
    return max(fitting)


def spatial_attention_pallas(x, w, b, *, vmem_block_budget_bytes=24 << 20):
    """x: (B, C, H, W); w: (1, 2, K, K) conv weight; b: (1,) conv bias.
    Returns sigmoid attention map of shape (B, 1, H, W)."""
    B, C, H, W = x.shape
    K = w.shape[-1]
    HW = H * W
    assert w.shape == (1, 2, K, K)
    assert b.shape == (1,)

    t_mat = _build_conv_toeplitz(w, H, W)                    # (2, HW, HW) f32
    b_f32 = b.astype(jnp.float32)
    x_flat = x.reshape(B, C, HW)                             # lane-dense layout

    elt = jnp.dtype(x.dtype).itemsize
    out_elt = elt
    # Double-buffered x block + output block per image.
    bytes_per_image_2buf = 2 * (C * HW * elt + HW * out_elt)
    t_bytes_2buf = 2 * (2 * HW * HW * 4)
    block_budget = max(vmem_block_budget_bytes - t_bytes_2buf, bytes_per_image_2buf)
    bt = _pick_batch_tile(B, bytes_per_image_2buf, block_budget)
    grid = (B // bt,)

    # VMEM limit: blocks + Toeplitz + in-kernel f32 intermediates + headroom,
    # capped well under v7x's 64 MiB physical VMEM.
    intermediates = 8 * bt * HW * 4
    vmem_limit = int(min(max(bt * bytes_per_image_2buf + t_bytes_2buf
                             + intermediates + (2 << 20), 16 << 20), 48 << 20))

    c_chunk = max(1, min(C, 8))
    kernel = partial(_spatial_attention_kernel, C=C, c_chunk=c_chunk)

    cost = pl.CostEstimate(
        flops=int(B * (2 * C * HW + 4 * HW * HW + 2 * HW)),
        transcendentals=int(B * HW),
        bytes_accessed=int(elt * B * C * HW + out_elt * B * HW
                           + 4 * (2 * HW * HW + 1)),
    )

    out_flat = pl.pallas_call(
        kernel,
        out_shape=jax.ShapeDtypeStruct((B, 1, HW), x.dtype),
        grid_spec=pltpu.PrefetchScalarGridSpec(
            num_scalar_prefetch=0,
            grid=grid,
            in_specs=[
                pl.BlockSpec((bt, C, HW), lambda i: (i, 0, 0)),
                pl.BlockSpec((2, HW, HW), lambda i: (0, 0, 0)),           # Toeplitz
                pl.BlockSpec(memory_space=pltpu.MemorySpace.SMEM),        # bias (1,)
            ],
            out_specs=pl.BlockSpec((bt, 1, HW), lambda i: (i, 0, 0)),
        ),
        compiler_params=pltpu.CompilerParams(
            dimension_semantics=("parallel",),
            vmem_limit_bytes=vmem_limit,
        ),
        cost_estimate=cost,
    )(x_flat, t_mat, b_f32)

    return out_flat.reshape(B, 1, H, W)


def spatial_attention_reference(x, w, b):
    """Independent pure-JAX reference mirroring the PyTorch forward."""
    max_map = jnp.max(x, axis=1, keepdims=True)
    avg_map = jnp.mean(x, axis=1, keepdims=True)
    stacked = jnp.concatenate([max_map, avg_map], axis=1)        # (B, 2, H, W)
    out = jax.lax.conv_general_dilated(
        stacked, w, window_strides=(1, 1), padding="SAME",
        dimension_numbers=("NCHW", "OIHW", "NCHW"),
        precision=jax.lax.Precision.HIGHEST)
    return jax.nn.sigmoid(out + b[0])


if __name__ == "__main__":
    B, C, H, W = 2, 4, 16, 16
    K = 7

    key = jax.random.PRNGKey(0)
    kx, kw, kb = jax.random.split(key, 3)

    x = jax.random.normal(kx, (B, C, H, W), dtype=jnp.float32)
    # shapes match nn.Conv2d(2, 1, kernel_size=7, padding=3)
    w = jax.random.normal(kw, (1, 2, K, K), dtype=jnp.float32) * (1.0 / math.sqrt(2 * K * K))
    b = jax.random.normal(kb, (1,), dtype=jnp.float32) * 0.1

    out = spatial_attention_pallas(x, w, b)
    out = jax.block_until_ready(out)

    ref = spatial_attention_reference(x, w, b)
    assert out.shape == (B, 1, H, W)
    err = float(jnp.max(jnp.abs(out - ref)))
    assert jnp.allclose(out, ref, rtol=1e-3, atol=1e-4), \
        f"mismatch vs reference: max abs err {err}"

    print("KERNEL_OK")
</pallas_src>

<mosaic_0001>
module attributes {stable_mosaic.version = 11 : i64} {
  func.func @_spatial_attention_kernel(%arg0: i32, %arg1: memref<1x4x256xf32, #tpu.memory_space<vmem>>, %arg2: memref<2x256x256xf32, #tpu.memory_space<vmem>>, %arg3: memref<1xf32, #tpu.memory_space<smem>>, %arg4: memref<1x1x256xf32, #tpu.memory_space<vmem>>) attributes {dimension_semantics = [#tpu.dimension_semantics<parallel>], iteration_bounds = array<i64: 2>, scalar_prefetch = 0 : i64, scratch_operands = 0 : i64, tpu.core_type = #tpu.core_type<tc>, window_params = [{transform_indices = @transform_0, window_bounds = array<i64: 1, 4, 256>}, {pipeline_mode = #tpu.pipeline_mode<synchronous>, transform_indices = @transform_1, window_bounds = array<i64: 2, 256, 256>}, {transform_indices = @transform_2, window_bounds = array<i64: 1>}, {transform_indices = @transform_3, window_bounds = array<i64: 1, 1, 256>}]} {
    %c0 = arith.constant 0 : index
    %c0_0 = arith.constant 0 : index
    %c0_1 = arith.constant 0 : index
    %0 = vector.load %arg1[%c0, %c0_0, %c0_1] : memref<1x4x256xf32, #tpu.memory_space<vmem>>, vector<1x4x256xf32>
    %cst = arith.constant dense<0xFF800000> : vector<1x256xf32>
    %1 = vector.multi_reduction <maximumf>, %0, %cst [1] : vector<1x4x256xf32> to vector<1x256xf32>
    %cst_2 = arith.constant dense<0.000000e+00> : vector<1x256xf32>
    %2 = vector.multi_reduction <add>, %0, %cst_2 [1] : vector<1x4x256xf32> to vector<1x256xf32>
    %cst_3 = arith.constant 2.500000e-01 : f32
    %3 = vector.broadcast %cst_3 : f32 to vector<1x256xf32>
    %4 = arith.mulf %2, %3 : vector<1x256xf32>
    %c0_4 = arith.constant 0 : index
    %c0_5 = arith.constant 0 : index
    %c0_6 = arith.constant 0 : index
    %5 = vector.load %arg2[%c0_4, %c0_5, %c0_6] : memref<2x256x256xf32, #tpu.memory_space<vmem>>, vector<1x256x256xf32>
    %6 = vector.shape_cast %5 : vector<1x256x256xf32> to vector<256x256xf32>
    %cst_7 = arith.constant dense<0.000000e+00> : vector<1x256xf32>
    %7 = tpu.matmul %1, %6, %cst_7 {dimension_numbers = #tpu.dot_dimension_numbers<[1], [0], [0], [1], [0, 0, 1, 1], [], []>, precision = #tpu.contract_precision<fp32>} : vector<1x256xf32>, vector<256x256xf32>, vector<1x256xf32> -> vector<1x256xf32>
    %c1 = arith.constant 1 : index
    %c0_8 = arith.constant 0 : index
    %c0_9 = arith.constant 0 : index
    %8 = vector.load %arg2[%c1, %c0_8, %c0_9] : memref<2x256x256xf32, #tpu.memory_space<vmem>>, vector<1x256x256xf32>
    %9 = vector.shape_cast %8 : vector<1x256x256xf32> to vector<256x256xf32>
    %cst_10 = arith.constant dense<0.000000e+00> : vector<1x256xf32>
    %10 = tpu.matmul %4, %9, %cst_10 {dimension_numbers = #tpu.dot_dimension_numbers<[1], [0], [0], [1], [0, 0, 1, 1], [], []>, precision = #tpu.contract_precision<fp32>} : vector<1x256xf32>, vector<256x256xf32>, vector<1x256xf32> -> vector<1x256xf32>
    %11 = arith.addf %7, %10 : vector<1x256xf32>
    %c0_11 = arith.constant 0 : index
    %12 = memref.load %arg3[%c0_11] : memref<1xf32, #tpu.memory_space<smem>>
    %13 = vector.broadcast %12 : f32 to vector<1x256xf32>
    %14 = arith.addf %11, %13 : vector<1x256xf32>
    %15 = arith.negf %14 : vector<1x256xf32>
    %16 = math.exp %15 : vector<1x256xf32>
    %cst_12 = arith.constant 1.000000e+00 : f32
    %17 = vector.broadcast %cst_12 : f32 to vector<1x256xf32>
    %18 = arith.addf %17, %16 : vector<1x256xf32>
    %19 = arith.divf %17, %18 : vector<1x256xf32>
    %20 = vector.shape_cast %19 : vector<1x256xf32> to vector<1x1x256xf32>
    %c0_13 = arith.constant 0 : index
    %c0_14 = arith.constant 0 : index
    %c0_15 = arith.constant 0 : index
    %21 = vector.load %arg4[%c0_13, %c0_14, %c0_15] : memref<1x1x256xf32, #tpu.memory_space<vmem>>, vector<1x1x256xf32>
    tpu.vector_store %arg4[%c0_13, %c0_14, %c0_15], %20 {strides = array<i32>} : memref<1x1x256xf32, #tpu.memory_space<vmem>>, vector<1x1x256xf32>,
    return
  }
  func.func @transform_0(%arg0: i32) -> (i32, i32, i32) {
    %c0_i32 = arith.constant 0 : i32
    %c0_i32_0 = arith.constant 0 : i32
    %c0_i32_1 = arith.constant 0 : i32
    return %arg0, %c0_i32, %c0_i32_0 : i32, i32, i32
  }
  func.func @transform_1(%arg0: i32) -> (i32, i32, i32) {
    %c0_i32 = arith.constant 0 : i32
    %c0_i32_0 = arith.constant 0 : i32
    %c0_i32_1 = arith.constant 0 : i32
    %c0_i32_2 = arith.constant 0 : i32
    return %c0_i32, %c0_i32_0, %c0_i32_1 : i32, i32, i32
  }
  func.func @transform_2(%arg0: i32) -> i32 {
    %c0_i32 = arith.constant 0 : i32
    %c0_i32_0 = arith.constant 0 : i32
    return %c0_i32 : i32
  }
  func.func @transform_3(%arg0: i32) -> (i32, i32, i32) {
    %c0_i32 = arith.constant 0 : i32
    %c0_i32_0 = arith.constant 0 : i32
    %c0_i32_1 = arith.constant 0 : i32
    return %arg0, %c0_i32, %c0_i32_0 : i32, i32, i32
  }
}

</mosaic_0001>

<llo_original>
// kernel: tpu_custom_call.1
$region0: #{tpu_custom_call.1}
  #allocation0 [shape = 'u32[]', space=smem, size = 0x4, offset = 0x4, fixed_abs, tag = 'smem constant byte address 0x4 - core index']
  #allocation1 [shape = 'u32[144,128]{1,0:T(1,128)}', space=vmem, size = 0x12000, scoped, tag = 'internal scratch']
  #allocation2 [shape = 'f32[1]{0:T(128)S(6)}', space=smem, size = 0x200, scoped, tag = 'scoped memory for tpu_custom_call.1']
  %s0 = inlined_call_operand.hbm [shape: f32[2,4,256], index: 0, kind: input, shape index: {}]
  %s1 = inlined_call_operand.hbm [shape: f32[2,256,256], index: 1, kind: input, shape index: {}]
  %s2 = inlined_call_operand.<no memory space> [shape: f32[1], index: 2, kind: input, shape index: {}]
  %s3 = inlined_call_operand.hbm [shape: f32[2,1,256], index: 3, kind: output, shape index: {}]
  %s4 = sld [smem:[#allocation0]]
  $region53: #{tpu_custom_call.1} parent=0
    _
  %s6 = ssub.s32 1, %s4
  %s7 = scalar_select 0, %s6, %s4
  %8 = sst [smem:[#allocation2]] %s2
  $region1: #{tpu_custom_call.1} parent=0
    #allocation3 [shape = 'u8[8192]{0}', space=vmem, size = 0x2000, scoped, tag = 'input window, operand 0']
    #allocation4 [shape = 's32[2]{0}', space=sflag, size = 0x8, scoped, tag = 'scoped memory for tpu_custom_call.1']
    #allocation5 [shape = 's32[2]{0}', space=sflag, size = 0x8, scoped, tag = 'scoped memory for tpu_custom_call.1']
    #allocation6 [shape = 'u8[524288]{0}', space=vmem, size = 0x80000, scoped, tag = 'input window, operand 1, single buffered']
    #allocation7 [shape = 's32[1]{0}', space=sflag, size = 0x4, scoped, tag = 'scoped memory for tpu_custom_call.1']
    #allocation8 [shape = 'u8[2048]{0}', space=vmem, size = 0x800, scoped, tag = 'output window, operand 0']
    %9 = vsyncpa [#allocation4], 0
    %s10 = scalar_lea.sflag [#allocation4], 1
    %11 = vsyncpa %s10, 0
    %12 = vsyncpa [#allocation7], 0
    %13 = vsyncpa [#allocation5], 0
    %s14 = scalar_lea.sflag [#allocation5], 1
    %15 = vsyncpa %s14, 0
    loop: start=0, step=1, limit=4
    $region2: #{tpu_custom_call.1} parent=1 // loop_pre_header
      _
    $region3: #{tpu_custom_call.1} parent=1 // loop_header
      %s17 = sphi 0, %s21
      %p18 = scmp.ge.s32.totalorder %s17, 4
      %s27 = sphi 0, %s29
      %s30 = sphi 0, %s27
      %s31 = sphi 0, %s30
      %s47 = sphi 0, %s31
      %s51 = sphi 0, %s51
      %s53 = sphi 0, %s51
      %s54 = sphi 0, %s53
      %s68 = sphi 0, %s54
      %s72 = sphi 0, %s72
      %s74 = sphi 0, %s72
      %s75 = sphi 0, %s74
      %s89 = sphi 0, %s75
      %s95 = sphi 0, %s97
      %s98 = sphi 0, %s95
      %s99 = sphi 0, %s98
      %s115 = sphi 0, %s99
    $region4: #{tpu_custom_call.1} parent=1 // loop_header_branch
      %20 = sbr.rel (%p18) target = $region8
    $region5: #{tpu_custom_call.1} parent=1 // loop_body
      %s22 = ssub.s32 %s17, 1
      %s23 = ssub.s32 %s17, 2
      %s24 = sadd.s32 %s17, 1
      %s25 = ssub.s32 %s17, %s24
      %p26 = scmp.eq.s32.totalorder %s25, 0
      %s28 = sadd.s32 %s27, 1
      %s29 = scalar_select %p26, %s27, %s28
      %p32 = pneg %p26
      %p33 = scmp.eq.s32.totalorder %s17, 1
      %p34 = por %p32, %p33
      %p35 = scmp.ne.s32.totalorder %s27, %s30
      %p36 = scmp.eq.s32.totalorder %s17, 0
      %p37 = por %p35, %p36
      %p38 = scmp.ne.s32.totalorder %s27, %s30
      %p39 = scmp.eq.s32.totalorder %s22, 1
      %p40 = por %p38, %p39
      %p41 = scmp.ne.s32.totalorder %s30, %s31
      %p42 = scmp.eq.s32.totalorder %s22, 0
      %p43 = por %p41, %p42
      %p44 = scmp.ne.s32.totalorder %s30, %s31
      %p45 = scmp.eq.s32.totalorder %s23, 1
      %p46 = por %p44, %p45
      %p48 = scmp.ne.s32.totalorder %s31, %s47
      %p49 = scmp.eq.s32.totalorder %s23, 0
      %p50 = por %p48, %p49
      %s52 = sadd.s32 %s51, 1
      %p55 = scmp.eq.s32.totalorder %s17, 1
      %p56 = scmp.ne.s32.totalorder %s51, %s53
      %p57 = scmp.eq.s32.totalorder %s17, 0
      %p58 = por %p56, %p57
      %p59 = scmp.ne.s32.totalorder %s51, %s53
      %p60 = scmp.eq.s32.totalorder %s22, 1
      %p61 = por %p59, %p60
      %p62 = scmp.ne.s32.totalorder %s53, %s54
      %p63 = scmp.eq.s32.totalorder %s22, 0
      %p64 = por %p62, %p63
      %p65 = scmp.ne.s32.totalorder %s53, %s54
      %p66 = scmp.eq.s32.totalorder %s23, 1
      %p67 = por %p65, %p66
      %p69 = scmp.ne.s32.totalorder %s54, %s68
      %p70 = scmp.eq.s32.totalorder %s23, 0
      %p71 = por %p69, %p70
      %s73 = sadd.s32 %s72, 1
      %p76 = scmp.eq.s32.totalorder %s17, 1
      %p77 = scmp.ne.s32.totalorder %s72, %s74
      %p78 = scmp.eq.s32.totalorder %s17, 0
      %p79 = por %p77, %p78
      %p80 = scmp.ne.s32.totalorder %s72, %s74
      %p81 = scmp.eq.s32.totalorder %s22, 1
      %p82 = por %p80, %p81
      %p83 = scmp.ne.s32.totalorder %s74, %s75
      %p84 = scmp.eq.s32.totalorder %s22, 0
      %p85 = por %p83, %p84
      %p86 = scmp.ne.s32.totalorder %s74, %s75
      %p87 = scmp.eq.s32.totalorder %s23, 1
      %p88 = por %p86, %p87
      %p90 = scmp.ne.s32.totalorder %s75, %s89
      %p91 = scmp.eq.s32.totalorder %s23, 0
      %p92 = por %p90, %p91
      %s93 = ssub.s32 %s17, %s24
      %p94 = scmp.eq.s32.totalorder %s93, 0
      %s96 = sadd.s32 %s95, 1
      %s97 = scalar_select %p94, %s95, %s96
      %p100 = pneg %p94
      %p101 = scmp.eq.s32.totalorder %s17, 1
      %p102 = por %p100, %p101
      %p103 = scmp.ne.s32.totalorder %s95, %s98
      %p104 = scmp.eq.s32.totalorder %s17, 0
      %p105 = por %p103, %p104
      %p106 = scmp.ne.s32.totalorder %s95, %s98
      %p107 = scmp.eq.s32.totalorder %s22, 1
      %p108 = por %p106, %p107
      %p109 = scmp.ne.s32.totalorder %s98, %s99
      %p110 = scmp.eq.s32.totalorder %s22, 0
      %p111 = por %p109, %p110
      %p112 = scmp.ne.s32.totalorder %s98, %s99
      %p113 = scmp.eq.s32.totalorder %s23, 1
      %p114 = por %p112, %p113
      %p116 = scmp.ne.s32.totalorder %s99, %s115
      %p117 = scmp.eq.s32.totalorder %s23, 0
      %p118 = por %p116, %p117
      %p119 = scmp.le.s32.totalorder 1, %s17
      %p120 = scmp.lt.s32.totalorder %s17, 3
      %p121 = pnand %p119, %p120
      %p122 = pneg %p121
      // Predicated region
      $region9: #{tpu_custom_call.1} parent=5 // pred_check
        _
      $region10: #{tpu_custom_call.1} parent=5 // pred_check_branch
        %124 = sbr.rel (%p121) target = $region12
      $region11: #{tpu_custom_call.1} parent=5 // pred_region
        %s125 = ssub.s32 %s17, 1
        // Predicated region
        $region13: #{tpu_custom_call.1} parent=11 // pred_check
          %p126 = pneg %p64
        $region14: #{tpu_custom_call.1} parent=11 // pred_check_branch
          %128 = sbr.rel (%p126) target = $region16
        $region15: #{tpu_custom_call.1} parent=11 // pred_region
          %s130 = ssub.s32 16384, 16384
          %131 = vsyncadd [#allocation7], %s130
          %s132 = sshll.u32 [#allocation6], 4
          %s133 = int_to_ptr.vmem [resolvable:$true] %s132
          %138 = dma.hbm_to_vmem [thread:$0]  %s1, 16384, %s133, [#allocation7], 256, 256, 16
        $region16: #{tpu_custom_call.1} parent=11 // pred_fallthru
          _
        // Predicated region
        $region17: #{tpu_custom_call.1} parent=11 // pred_check
          %p139 = pneg %p85
        $region18: #{tpu_custom_call.1} parent=11 // pred_check_branch
          %141 = sbr.rel (%p139) target = $region20
        $region19: #{tpu_custom_call.1} parent=11 // pred_region
          _
        $region20: #{tpu_custom_call.1} parent=11 // pred_fallthru
          _
      $region12: #{tpu_custom_call.1} parent=5 // pred_fallthru
        _
      %p142 = scmp.lt.s32.totalorder %s17, 2
      // Predicated region
      $region21: #{tpu_custom_call.1} parent=5 // pred_check
        %p143 = pneg %p142
      $region22: #{tpu_custom_call.1} parent=5 // pred_check_branch
        %145 = sbr.rel (%p143) target = $region24
      $region23: #{tpu_custom_call.1} parent=5 // pred_region
        // Predicated region
        $region25: #{tpu_custom_call.1} parent=23 // pred_check
          %p146 = pneg %p37
        $region26: #{tpu_custom_call.1} parent=23 // pred_check_branch
          %148 = sbr.rel (%p146) target = $region28
        $region27: #{tpu_custom_call.1} parent=23 // pred_region
          %s149 = sand.u32 %s27, 1
          %s150 = scalar_lea.sflag [#allocation4], %s149
          %s151 = sand.u32 %s27, 1
          %s152 = smul.addr %s151, 8
          %s153 = scalar_lea.vmem [#allocation3], %s152
          %s155 = ssub.s32 128, 128
          %156 = vsyncadd %s150, %s155
          %s157 = smul.addr %s17, 2
          %s158 = smul.addr %s157, 64
          %s159 = scalar_lea.hbm %s0, %s158
          %s161 = sshll.u32 %s153, 4
          %s162 = int_to_ptr.vmem [resolvable:$true] %s161
          %164 = dma.hbm_to_vmem [thread:$0]  %s159, 128, %s162, %s150
        $region28: #{tpu_custom_call.1} parent=23 // pred_fallthru
          _
      $region24: #{tpu_custom_call.1} parent=5 // pred_fallthru
        _
      %p165 = scmp.le.s32.totalorder 1, %s17
      %p166 = scmp.lt.s32.totalorder %s17, 3
      %p167 = pnand %p165, %p166
      %p168 = pneg %p167
      // Predicated region
      $region29: #{tpu_custom_call.1} parent=5 // pred_check
        _
      $region30: #{tpu_custom_call.1} parent=5 // pred_check_branch
        %170 = sbr.rel (%p167) target = $region32
      $region31: #{tpu_custom_call.1} parent=5 // pred_region
        %s171 = ssub.s32 %s17, 1
        %s172 = sand.u32 %s30, 1
        %s173 = scalar_lea.sflag [#allocation4], %s172
        %s174 = sand.u32 %s30, 1
        %s175 = smul.addr %s174, 8
        %s176 = scalar_lea.vmem [#allocation3], %s175
        // Predicated region
        $region33: #{tpu_custom_call.1} parent=31 // pred_check
          %p177 = pneg %p43
        $region34: #{tpu_custom_call.1} parent=31 // pred_check_branch
          %179 = sbr.rel (%p177) target = $region36
        $region35: #{tpu_custom_call.1} parent=31 // pred_region
          %180 = dma.done %s173, 128
        $region36: #{tpu_custom_call.1} parent=31 // pred_fallthru
          _
        // Predicated region
        $region37: #{tpu_custom_call.1} parent=31 // pred_check
          %p181 = pneg %p64
        $region38: #{tpu_custom_call.1} parent=31 // pred_check_branch
          %183 = sbr.rel (%p181) target = $region40
        $region39: #{tpu_custom_call.1} parent=31 // pred_region
          %184 = dma.done [#allocation7], 16384
        $region40: #{tpu_custom_call.1} parent=31 // pred_fallthru
          _
        %s185 = sand.u32 %s30, 1
        %s186 = scalar_lea.sflag [#allocation4], %s185
        %s187 = sand.u32 %s30, 1
        %s188 = smul.addr %s187, 8
        %s189 = scalar_lea.vmem [#allocation3], %s188
        %p190 = pneg %p43
        %p191 = pneg %p40
        %p192 = pneg %p64
        %p193 = pneg %p61
        %p194 = pneg %p85
        %p195 = pneg %p82
        %p196 = pneg %p111
        %p197 = pneg %p108
        %s198 = sand.u32 %s98, 1
        %s199 = scalar_lea.sflag [#allocation5], %s198
        %s200 = sand.u32 %s98, 1
        %s201 = smul.addr %s200, 2
        %s202 = scalar_lea.vmem [#allocation8], %s201
        %v203 = vld [vmem:[%s176] sm:$0xff]
        %v205 = vcombine.high %v203, %v203
        %vm207 = vcmask 1043456
        %v208 = vsel %vm207, %v203, -inf
        %v209 = vrot.slane %v208, 4
        %v210 = vmax.f32 %v208, %v209
        %v211 = vrot.slane %v210, 2
        %v212 = vmax.f32 %v210, %v211
        %v213 = vrot.slane %v212, 1
        %v214 = vmax.f32 %v212, %v213
        %v215 = vsel %vm207, %v205, -inf
        %v216 = vrot.slane %v215, 4
        %v217 = vmax.f32 %v215, %v216
        %v218 = vrot.slane %v217, 2
        %v219 = vmax.f32 %v217, %v218
        %v220 = vrot.slane %v219, 1
        %v221 = vmax.f32 %v219, %v220
        %v222 = vsel %vm207, %v203, 0.0
        %v223 = vrot.slane %v222, 4
        %v224 = vadd.f32 %v222, %v223
        %v225 = vrot.slane %v224, 2
        %v226 = vadd.f32 %v224, %v225
        %v227 = vrot.slane %v226, 1
        %v228 = vadd.f32 %v226, %v227
        %v229 = vsel %vm207, %v205, 0.0
        %v230 = vrot.slane %v229, 4
        %v231 = vadd.f32 %v229, %v230
        %v232 = vrot.slane %v231, 2
        %v233 = vadd.f32 %v231, %v232
        %v234 = vrot.slane %v233, 1
        %v235 = vadd.f32 %v233, %v234
        %v236 = vmul.f32 %v228, 0.25
        %v237 = vmul.f32 %v235, 0.25
        %v238 = vld [vmem:[#allocation6] sm:$0xff]
        %v239 = vld [vmem:[#allocation6 + $0x8] sm:$0xff]
        %v240 = vld [vmem:[#allocation6 + $0x10] sm:$0xff]
        %v241 = vld [vmem:[#allocation6 + $0x18] sm:$0xff]
        %v242 = vld [vmem:[#allocation6 + $0x20] sm:$0xff]
        %v243 = vld [vmem:[#allocation6 + $0x28] sm:$0xff]
        %v244 = vld [vmem:[#allocation6 + $0x30] sm:$0xff]
        %v245 = vld [vmem:[#allocation6 + $0x38] sm:$0xff]
        %v246 = vld [vmem:[#allocation6 + $0x40] sm:$0xff]
        %v247 = vld [vmem:[#allocation6 + $0x48] sm:$0xff]
        %v248 = vld [vmem:[#allocation6 + $0x50] sm:$0xff]
        %v249 = vld [vmem:[#allocation6 + $0x58] sm:$0xff]
        %v250 = vld [vmem:[#allocation6 + $0x60] sm:$0xff]
        %v251 = vld [vmem:[#allocation6 + $0x68] sm:$0xff]
        %v252 = vld [vmem:[#allocation6 + $0x70] sm:$0xff]
        %v253 = vld [vmem:[#allocation6 + $0x78] sm:$0xff]
        %v254 = vld [vmem:[#allocation6 + $0x80] sm:$0xff]
        %v255 = vld [vmem:[#allocation6 + $0x88] sm:$0xff]
        %v256 = vld [vmem:[#allocation6 + $0x90] sm:$0xff]
        %v257 = vld [vmem:[#allocation6 + $0x98] sm:$0xff]
        %v258 = vld [vmem:[#allocation6 + $0xa0] sm:$0xff]
        %v259 = vld [vmem:[#allocation6 + $0xa8] sm:$0xff]
        %v260 = vld [vmem:[#allocation6 + $0xb0] sm:$0xff]
        %v261 = vld [vmem:[#allocation6 + $0xb8] sm:$0xff]
        %v262 = vld [vmem:[#allocation6 + $0xc0] sm:$0xff]
        %v263 = vld [vmem:[#allocation6 + $0xc8] sm:$0xff]
        %v264 = vld [vmem:[#allocation6 + $0xd0] sm:$0xff]
        %v265 = vld [vmem:[#allocation6 + $0xd8] sm:$0xff]
        %v266 = vld [vmem:[#allocation6 + $0xe0] sm:$0xff]
        %v267 = vld [vmem:[#allocation6 + $0xe8] sm:$0xff]
        %v268 = vld [vmem:[#allocation6 + $0xf0] sm:$0xff]
        %v269 = vld [vmem:[#allocation6 + $0xf8] sm:$0xff]
        %v270 = vld [vmem:[#allocation6 + $0x100] sm:$0xff]
        %v271 = vld [vmem:[#allocation6 + $0x108] sm:$0xff]
        %v272 = vld [vmem:[#allocation6 + $0x110] sm:$0xff]
        %v273 = vld [vmem:[#allocation6 + $0x118] sm:$0xff]
        %v274 = vld [vmem:[#allocation6 + $0x120] sm:$0xff]
        %v275 = vld [vmem:[#allocation6 + $0x128] sm:$0xff]
        %v276 = vld [vmem:[#allocation6 + $0x130] sm:$0xff]
        %v277 = vld [vmem:[#allocation6 + $0x138] sm:$0xff]
        %v278 = vld [vmem:[#allocation6 + $0x140] sm:$0xff]
        %v279 = vld [vmem:[#allocation6 + $0x148] sm:$0xff]
        %v280 = vld [vmem:[#allocation6 + $0x150] sm:$0xff]
        %v281 = vld [vmem:[#allocation6 + $0x158] sm:$0xff]
        %v282 = vld [vmem:[#allocation6 + $0x160] sm:$0xff]
        %v283 = vld [vmem:[#allocation6 + $0x168] sm:$0xff]
        %v284 = vld [vmem:[#allocation6 + $0x170] sm:$0xff]
        %v285 = vld [vmem:[#allocation6 + $0x178] sm:$0xff]
        %v286 = vld [vmem:[#allocation6 + $0x180] sm:$0xff]
        %v287 = vld [vmem:[#allocation6 + $0x188] sm:$0xff]
        %v288 = vld [vmem:[#allocation6 + $0x190] sm:$0xff]
        %v289 = vld [vmem:[#allocation6 + $0x198] sm:$0xff]
        %v290 = vld [vmem:[#allocation6 + $0x1a0] sm:$0xff]
        %v291 = vld [vmem:[#allocation6 + $0x1a8] sm:$0xff]
        %v292 = vld [vmem:[#allocation6 + $0x1b0] sm:$0xff]
        %v293 = vld [vmem:[#allocation6 + $0x1b8] sm:$0xff]
        %v294 = vld [vmem:[#allocation6 + $0x1c0] sm:$0xff]
        %v295 = vld [vmem:[#allocation6 + $0x1c8] sm:$0xff]
        %v296 = vld [vmem:[#allocation6 + $0x1d0] sm:$0xff]
        %v297 = vld [vmem:[#allocation6 + $0x1d8] sm:$0xff]
        %v298 = vld [vmem:[#allocation6 + $0x1e0] sm:$0xff]
        %v299 = vld [vmem:[#allocation6 + $0x1e8] sm:$0xff]
        %v300 = vld [vmem:[#allocation6 + $0x1f0] sm:$0xff]
        %v301 = vld [vmem:[#allocation6 + $0x1f8] sm:$0xff]
        %s302 = scalar_lea.vmem [#allocation6], 512
        %v303 = vld [vmem:[%s302] sm:$0xff]
        %v304 = vld [vmem:[%s302 + $0x8] sm:$0xff]
        %v305 = vld [vmem:[%s302 + $0x10] sm:$0xff]
        %v306 = vld [vmem:[%s302 + $0x18] sm:$0xff]
        %v307 = vld [vmem:[%s302 + $0x20] sm:$0xff]
        %v308 = vld [vmem:[%s302 + $0x28] sm:$0xff]
        %v309 = vld [vmem:[%s302 + $0x30] sm:$0xff]
        %v310 = vld [vmem:[%s302 + $0x38] sm:$0xff]
        %v311 = vld [vmem:[%s302 + $0x40] sm:$0xff]
        %v312 = vld [vmem:[%s302 + $0x48] sm:$0xff]
        %v313 = vld [vmem:[%s302 + $0x50] sm:$0xff]
        %v314 = vld [vmem:[%s302 + $0x58] sm:$0xff]
        %v315 = vld [vmem:[%s302 + $0x60] sm:$0xff]
        %v316 = vld [vmem:[%s302 + $0x68] sm:$0xff]
        %v317 = vld [vmem:[%s302 + $0x70] sm:$0xff]
        %v318 = vld [vmem:[%s302 + $0x78] sm:$0xff]
        %v319 = vld [vmem:[%s302 + $0x80] sm:$0xff]
        %v320 = vld [vmem:[%s302 + $0x88] sm:$0xff]
        %v321 = vld [vmem:[%s302 + $0x90] sm:$0xff]
        %v322 = vld [vmem:[%s302 + $0x98] sm:$0xff]
        %v323 = vld [vmem:[%s302 + $0xa0] sm:$0xff]
        %v324 = vld [vmem:[%s302 + $0xa8] sm:$0xff]
        %v325 = vld [vmem:[%s302 + $0xb0] sm:$0xff]
        %v326 = vld [vmem:[%s302 + $0xb8] sm:$0xff]
        %v327 = vld [vmem:[%s302 + $0xc0] sm:$0xff]
        %v328 = vld [vmem:[%s302 + $0xc8] sm:$0xff]
        %v329 = vld [vmem:[%s302 + $0xd0] sm:$0xff]
        %v330 = vld [vmem:[%s302 + $0xd8] sm:$0xff]
        %v331 = vld [vmem:[%s302 + $0xe0] sm:$0xff]
        %v332 = vld [vmem:[%s302 + $0xe8] sm:$0xff]
        %v333 = vld [vmem:[%s302 + $0xf0] sm:$0xff]
        %v334 = vld [vmem:[%s302 + $0xf8] sm:$0xff]
        %v335 = vld [vmem:[%s302 + $0x100] sm:$0xff]
        %v336 = vld [vmem:[%s302 + $0x108] sm:$0xff]
        %v337 = vld [vmem:[%s302 + $0x110] sm:$0xff]
        %v338 = vld [vmem:[%s302 + $0x118] sm:$0xff]
        %v339 = vld [vmem:[%s302 + $0x120] sm:$0xff]
        %v340 = vld [vmem:[%s302 + $0x128] sm:$0xff]
        %v341 = vld [vmem:[%s302 + $0x130] sm:$0xff]
        %v342 = vld [vmem:[%s302 + $0x138] sm:$0xff]
        %v343 = vld [vmem:[%s302 + $0x140] sm:$0xff]
        %v344 = vld [vmem:[%s302 + $0x148] sm:$0xff]
        %v345 = vld [vmem:[%s302 + $0x150] sm:$0xff]
        %v346 = vld [vmem:[%s302 + $0x158] sm:$0xff]
        %v347 = vld [vmem:[%s302 + $0x160] sm:$0xff]
        %v348 = vld [vmem:[%s302 + $0x168] sm:$0xff]
        %v349 = vld [vmem:[%s302 + $0x170] sm:$0xff]
        %v350 = vld [vmem:[%s302 + $0x178] sm:$0xff]
        %v351 = vld [vmem:[%s302 + $0x180] sm:$0xff]
        %v352 = vld [vmem:[%s302 + $0x188] sm:$0xff]
        %v353 = vld [vmem:[%s302 + $0x190] sm:$0xff]
        %v354 = vld [vmem:[%s302 + $0x198] sm:$0xff]
        %v355 = vld [vmem:[%s302 + $0x1a0] sm:$0xff]
        %v356 = vld [vmem:[%s302 + $0x1a8] sm:$0xff]
        %v357 = vld [vmem:[%s302 + $0x1b0] sm:$0xff]
        %v358 = vld [vmem:[%s302 + $0x1b8] sm:$0xff]
        %v359 = vld [vmem:[%s302 + $0x1c0] sm:$0xff]
        %v360 = vld [vmem:[%s302 + $0x1c8] sm:$0xff]
        %v361 = vld [vmem:[%s302 + $0x1d0] sm:$0xff]
        %v362 = vld [vmem:[%s302 + $0x1d8] sm:$0xff]
        %v363 = vld [vmem:[%s302 + $0x1e0] sm:$0xff]
        %v364 = vld [vmem:[%s302 + $0x1e8] sm:$0xff]
        %v365 = vld [vmem:[%s302 + $0x1f0] sm:$0xff]
        %v366 = vld [vmem:[%s302 + $0x1f8] sm:$0xff]
        %v367 = vand.u32 %v334, 4294901760
        %368 = vmatprep.subr.mxu0 %v367
        %v369 = vand.u32 %v333, 4294901760
        %370 = vmatpush1.msra.mxu0 %v369
        %v371 = vand.u32 %v332, 4294901760
        %372 = vmatprep.subr.mxu0 %v371
        %v373 = vand.u32 %v331, 4294901760
        %374 = vmatpush1.msra.mxu0 %v373
        %v375 = vand.u32 %v330, 4294901760
        %376 = vmatprep.subr.mxu0 %v375
        %v377 = vand.u32 %v329, 4294901760
        %378 = vmatpush1.msra.mxu0 %v377
        %v379 = vand.u32 %v328, 4294901760
        %380 = vmatprep.subr.mxu0 %v379
        %v381 = vand.u32 %v327, 4294901760
        %382 = vmatpush1.msra.mxu0 %v381
        %v383 = vand.u32 %v326, 4294901760
        %384 = vmatprep.subr.mxu0 %v383
        %v385 = vand.u32 %v325, 4294901760
        %386 = vmatpush1.msra.mxu0 %v385
        %v387 = vand.u32 %v324, 4294901760
        %388 = vmatprep.subr.mxu0 %v387
        %v389 = vand.u32 %v323, 4294901760
        %390 = vmatpush1.msra.mxu0 %v389
        %v391 = vand.u32 %v322, 4294901760
        %392 = vmatprep.subr.mxu0 %v391
        %v393 = vand.u32 %v321, 4294901760
        %394 = vmatpush1.msra.mxu0 %v393
        %v395 = vand.u32 %v320, 4294901760
        %396 = vmatprep.subr.mxu0 %v395
        %v397 = vand.u32 %v319, 4294901760
        %398 = vmatpush1.msra.mxu0 %v397
        %v399 = vand.u32 %v318, 4294901760
        %400 = vmatprep.subr.mxu0 %v399
        %v401 = vand.u32 %v317, 4294901760
        %402 = vmatpush1.msra.mxu0 %v401
        %v403 = vand.u32 %v316, 4294901760
        %404 = vmatprep.subr.mxu0 %v403
        %v405 = vand.u32 %v315, 4294901760
        %406 = vmatpush1.msra.mxu0 %v405
        %v407 = vand.u32 %v314, 4294901760
        %408 = vmatprep.subr.mxu0 %v407
        %v409 = vand.u32 %v313, 4294901760
        %410 = vmatpush1.msra.mxu0 %v409
        %v411 = vand.u32 %v312, 4294901760
        %412 = vmatprep.subr.mxu0 %v411
        %v413 = vand.u32 %v311, 4294901760
        %414 = vmatpush1.msra.mxu0 %v413
        %v415 = vand.u32 %v310, 4294901760
        %416 = vmatprep.subr.mxu0 %v415
        %v417 = vand.u32 %v309, 4294901760
        %418 = vmatpush1.msra.mxu0 %v417
        %v419 = vand.u32 %v308, 4294901760
        %420 = vmatprep.subr.mxu0 %v419
        %v421 = vand.u32 %v307, 4294901760
        %422 = vmatpush1.msra.mxu0 %v421
        %v423 = vand.u32 %v306, 4294901760
        %424 = vmatprep.subr.mxu0 %v423
        %v425 = vand.u32 %v305, 4294901760
        %426 = vmatpush1.msra.mxu0 %v425
        %v427 = vand.u32 %v304, 4294901760
        %428 = vmatprep.subr.mxu0 %v427
        %v429 = vand.u32 %v303, 4294901760
        %430 = vmatpush1.msra.mxu0 %v429
        %v431 = vand.u32 %v366, 4294901760
        %432 = vmatprep.subr.mxu0 %v431
        %v433 = vand.u32 %v365, 4294901760
        %434 = vmatpush2.msra.mxu0 %v433
        %v435 = vand.u32 %v364, 4294901760
        %436 = vmatprep.subr.mxu0 %v435
        %v437 = vand.u32 %v363, 4294901760
        %438 = vmatpush2.msra.mxu0 %v437
        %v439 = vand.u32 %v362, 4294901760
        %440 = vmatprep.subr.mxu0 %v439
        %v441 = vand.u32 %v361, 4294901760
        %442 = vmatpush2.msra.mxu0 %v441
        %v443 = vand.u32 %v360, 4294901760
        %444 = vmatprep.subr.mxu0 %v443
        %v445 = vand.u32 %v359, 4294901760
        %446 = vmatpush2.msra.mxu0 %v445
        %v447 = vand.u32 %v358, 4294901760
        %448 = vmatprep.subr.mxu0 %v447
        %v449 = vand.u32 %v357, 4294901760
        %450 = vmatpush2.msra.mxu0 %v449
        %v451 = vand.u32 %v356, 4294901760
        %452 = vmatprep.subr.mxu0 %v451
        %v453 = vand.u32 %v355, 4294901760
        %454 = vmatpush2.msra.mxu0 %v453
        %v455 = vand.u32 %v354, 4294901760
        %456 = vmatprep.subr.mxu0 %v455
        %v457 = vand.u32 %v353, 4294901760
        %458 = vmatpush2.msra.mxu0 %v457
        %v459 = vand.u32 %v352, 4294901760
        %460 = vmatprep.subr.mxu0 %v459
        %v461 = vand.u32 %v351, 4294901760
        %462 = vmatpush2.msra.mxu0 %v461
        %v463 = vand.u32 %v350, 4294901760
        %464 = vmatprep.subr.mxu0 %v463
        %v465 = vand.u32 %v349, 4294901760
        %466 = vmatpush2.msra.mxu0 %v465
        %v467 = vand.u32 %v348, 4294901760
        %468 = vmatprep.subr.mxu0 %v467
        %v469 = vand.u32 %v347, 4294901760
        %470 = vmatpush2.msra.mxu0 %v469
        %v471 = vand.u32 %v346, 4294901760
        %472 = vmatprep.subr.mxu0 %v471
        %v473 = vand.u32 %v345, 4294901760
        %474 = vmatpush2.msra.mxu0 %v473
        %v475 = vand.u32 %v344, 4294901760
        %476 = vmatprep.subr.mxu0 %v475
        %v477 = vand.u32 %v343, 4294901760
        %478 = vmatpush2.msra.mxu0 %v477
        %v479 = vand.u32 %v342, 4294901760
        %480 = vmatprep.subr.mxu0 %v479
        %v481 = vand.u32 %v341, 4294901760
        %482 = vmatpush2.msra.mxu0 %v481
        %v483 = vand.u32 %v340, 4294901760
        %484 = vmatprep.subr.mxu0 %v483
        %v485 = vand.u32 %v339, 4294901760
        %486 = vmatpush2.msra.mxu0 %v485
        %v487 = vand.u32 %v338, 4294901760
        %488 = vmatprep.subr.mxu0 %v487
        %v489 = vand.u32 %v337, 4294901760
        %490 = vmatpush2.msra.mxu0 %v489
        %v491 = vand.u32 %v336, 4294901760
        %492 = vmatprep.subr.mxu0 %v491
        %v493 = vand.u32 %v335, 4294901760
        %494 = vmatpush2.msra.mxu0 %v493
        %v495 = vand.u32 %v237, 4294901760
        %v496 = vsub.f32 %v237, %v495
        %v497 = vand.u32 %v496, 4294901760
        %v498 = vsub.f32 %v496, %v497
        %v499 = vand.u32 %v498, 4294901760
        %500 = vmatprep.mubr.f32.mxu0 %v499
        %v501 = vand.u32 %v236, 4294901760
        %v502 = vsub.f32 %v236, %v501
        %v503 = vand.u32 %v502, 4294901760
        %v504 = vsub.f32 %v502, %v503
        %v505 = vand.u32 %v504, 4294901760
        %506 = vmatmul.mubr.f32.gmra.mxu0 %v505
        %v507 = vpop.f32.mrf.mxu0
        %v508 = vadd.f32 0.0, %v507
        %v509 = vpop.f32.mrf.mxu0
        %v510 = vadd.f32 0.0, %v509
        %511 = vdwg.mxu0
        %v512 = vand.u32 %v334, 4294901760
        %v513 = vsub.f32 %v334, %v512
        %v514 = vand.u32 %v513, 4294901760
        %v515 = vsub.f32 %v513, %v514
        %v516 = vand.u32 %v515, 4294901760
        %517 = vmatprep.subr.mxu0 %v516
        %v518 = vand.u32 %v333, 4294901760
        %v519 = vsub.f32 %v333, %v518
        %v520 = vand.u32 %v519, 4294901760
        %v521 = vsub.f32 %v519, %v520
        %v522 = vand.u32 %v521, 4294901760
        %523 = vmatpush1.msra.mxu0 %v522
        %v524 = vand.u32 %v332, 4294901760
        %v525 = vsub.f32 %v332, %v524
        %v526 = vand.u32 %v525, 4294901760
        %v527 = vsub.f32 %v525, %v526
        %v528 = vand.u32 %v527, 4294901760
        %529 = vmatprep.subr.mxu0 %v528
        %v530 = vand.u32 %v331, 4294901760
        %v531 = vsub.f32 %v331, %v530
        %v532 = vand.u32 %v531, 4294901760
        %v533 = vsub.f32 %v531, %v532
        %v534 = vand.u32 %v533, 4294901760
        %535 = vmatpush1.msra.mxu0 %v534
        %v536 = vand.u32 %v330, 4294901760
        %v537 = vsub.f32 %v330, %v536
        %v538 = vand.u32 %v537, 4294901760
        %v539 = vsub.f32 %v537, %v538
        %v540 = vand.u32 %v539, 4294901760
        %541 = vmatprep.subr.mxu0 %v540
        %v542 = vand.u32 %v329, 4294901760
        %v543 = vsub.f32 %v329, %v542
        %v544 = vand.u32 %v543, 4294901760
        %v545 = vsub.f32 %v543, %v544
        %v546 = vand.u32 %v545, 4294901760
        %547 = vmatpush1.msra.mxu0 %v546
        %v548 = vand.u32 %v328, 4294901760
        %v549 = vsub.f32 %v328, %v548
        %v550 = vand.u32 %v549, 4294901760
        %v551 = vsub.f32 %v549, %v550
        %v552 = vand.u32 %v551, 4294901760
        %553 = vmatprep.subr.mxu0 %v552
        %v554 = vand.u32 %v327, 4294901760
        %v555 = vsub.f32 %v327, %v554
        %v556 = vand.u32 %v555, 4294901760
        %v557 = vsub.f32 %v555, %v556
        %v558 = vand.u32 %v557, 4294901760
        %559 = vmatpush1.msra.mxu0 %v558
        %v560 = vand.u32 %v326, 4294901760
        %v561 = vsub.f32 %v326, %v560
        %v562 = vand.u32 %v561, 4294901760
        %v563 = vsub.f32 %v561, %v562
        %v564 = vand.u32 %v563, 4294901760
        %565 = vmatprep.subr.mxu0 %v564
        %v566 = vand.u32 %v325, 4294901760
        %v567 = vsub.f32 %v325, %v566
        %v568 = vand.u32 %v567, 4294901760
        %v569 = vsub.f32 %v567, %v568
        %v570 = vand.u32 %v569, 4294901760
        %571 = vmatpush1.msra.mxu0 %v570
        %v572 = vand.u32 %v324, 4294901760
        %v573 = vsub.f32 %v324, %v572
        %v574 = vand.u32 %v573, 4294901760
        %v575 = vsub.f32 %v573, %v574
        %v576 = vand.u32 %v575, 4294901760
        %577 = vmatprep.subr.mxu0 %v576
        %v578 = vand.u32 %v323, 4294901760
        %v579 = vsub.f32 %v323, %v578
        %v580 = vand.u32 %v579, 4294901760
        %v581 = vsub.f32 %v579, %v580
        %v582 = vand.u32 %v581, 4294901760
        %583 = vmatpush1.msra.mxu0 %v582
        %v584 = vand.u32 %v322, 4294901760
        %v585 = vsub.f32 %v322, %v584
        %v586 = vand.u32 %v585, 4294901760
        %v587 = vsub.f32 %v585, %v586
        %v588 = vand.u32 %v587, 4294901760
        %589 = vmatprep.subr.mxu0 %v588
        %v590 = vand.u32 %v321, 4294901760
        %v591 = vsub.f32 %v321, %v590
        %v592 = vand.u32 %v591, 4294901760
        %v593 = vsub.f32 %v591, %v592
        %v594 = vand.u32 %v593, 4294901760
        %595 = vmatpush1.msra.mxu0 %v594
        %v596 = vand.u32 %v320, 4294901760
        %v597 = vsub.f32 %v320, %v596
        %v598 = vand.u32 %v597, 4294901760
        %v599 = vsub.f32 %v597, %v598
        %v600 = vand.u32 %v599, 4294901760
        %601 = vmatprep.subr.mxu0 %v600
        %v602 = vand.u32 %v319, 4294901760
        %v603 = vsub.f32 %v319, %v602
        %v604 = vand.u32 %v603, 4294901760
        %v605 = vsub.f32 %v603, %v604
        %v606 = vand.u32 %v605, 4294901760
        %607 = vmatpush1.msra.mxu0 %v606
        %v608 = vand.u32 %v318, 4294901760
        %v609 = vsub.f32 %v318, %v608
        %v610 = vand.u32 %v609, 4294901760
        %v611 = vsub.f32 %v609, %v610
        %v612 = vand.u32 %v611, 4294901760
        %613 = vmatprep.subr.mxu0 %v612
        %v614 = vand.u32 %v317, 4294901760
        %v615 = vsub.f32 %v317, %v614
        %v616 = vand.u32 %v615, 4294901760
        %v617 = vsub.f32 %v615, %v616
        %v618 = vand.u32 %v617, 4294901760
        %619 = vmatpush1.msra.mxu0 %v618
        %v620 = vand.u32 %v316, 4294901760
        %v621 = vsub.f32 %v316, %v620
        %v622 = vand.u32 %v621, 4294901760
        %v623 = vsub.f32 %v621, %v622
        %v624 = vand.u32 %v623, 4294901760
        %625 = vmatprep.subr.mxu0 %v624
        %v626 = vand.u32 %v315, 4294901760
        %v627 = vsub.f32 %v315, %v626
        %v628 = vand.u32 %v627, 4294901760
        %v629 = vsub.f32 %v627, %v628
        %v630 = vand.u32 %v629, 4294901760
        %631 = vmatpush1.msra.mxu0 %v630
        %v632 = vand.u32 %v314, 4294901760
        %v633 = vsub.f32 %v314, %v632
        %v634 = vand.u32 %v633, 4294901760
        %v635 = vsub.f32 %v633, %v634
        %v636 = vand.u32 %v635, 4294901760
        %637 = vmatprep.subr.mxu0 %v636
        %v638 = vand.u32 %v313, 4294901760
        %v639 = vsub.f32 %v313, %v638
        %v640 = vand.u32 %v639, 4294901760
        %v641 = vsub.f32 %v639, %v640
        %v642 = vand.u32 %v641, 4294901760
        %643 = vmatpush1.msra.mxu0 %v642
        %v644 = vand.u32 %v312, 4294901760
        %v645 = vsub.f32 %v312, %v644
        %v646 = vand.u32 %v645, 4294901760
        %v647 = vsub.f32 %v645, %v646
        %v648 = vand.u32 %v647, 4294901760
        %649 = vmatprep.subr.mxu0 %v648
        %v650 = vand.u32 %v311, 4294901760
        %v651 = vsub.f32 %v311, %v650
        %v652 = vand.u32 %v651, 4294901760
        %v653 = vsub.f32 %v651, %v652
        %v654 = vand.u32 %v653, 4294901760
        %655 = vmatpush1.msra.mxu0 %v654
        %v656 = vand.u32 %v310, 4294901760
        %v657 = vsub.f32 %v310, %v656
        %v658 = vand.u32 %v657, 4294901760
        %v659 = vsub.f32 %v657, %v658
        %v660 = vand.u32 %v659, 4294901760
        %661 = vmatprep.subr.mxu0 %v660
        %v662 = vand.u32 %v309, 4294901760
        %v663 = vsub.f32 %v309, %v662
        %v664 = vand.u32 %v663, 4294901760
        %v665 = vsub.f32 %v663, %v664
        %v666 = vand.u32 %v665, 4294901760
        %667 = vmatpush1.msra.mxu0 %v666
        %v668 = vand.u32 %v308, 4294901760
        %v669 = vsub.f32 %v308, %v668
        %v670 = vand.u32 %v669, 4294901760
        %v671 = vsub.f32 %v669, %v670
        %v672 = vand.u32 %v671, 4294901760
        %673 = vmatprep.subr.mxu0 %v672
        %v674 = vand.u32 %v307, 4294901760
        %v675 = vsub.f32 %v307, %v674
        %v676 = vand.u32 %v675, 4294901760
        %v677 = vsub.f32 %v675, %v676
        %v678 = vand.u32 %v677, 4294901760
        %679 = vmatpush1.msra.mxu0 %v678
        %v680 = vand.u32 %v306, 4294901760
        %v681 = vsub.f32 %v306, %v680
        %v682 = vand.u32 %v681, 4294901760
        %v683 = vsub.f32 %v681, %v682
        %v684 = vand.u32 %v683, 4294901760
        %685 = vmatprep.subr.mxu0 %v684
        %v686 = vand.u32 %v305, 4294901760
        %v687 = vsub.f32 %v305, %v686
        %v688 = vand.u32 %v687, 4294901760
        %v689 = vsub.f32 %v687, %v688
        %v690 = vand.u32 %v689, 4294901760
        %691 = vmatpush1.msra.mxu0 %v690
        %v692 = vand.u32 %v304, 4294901760
        %v693 = vsub.f32 %v304, %v692
        %v694 = vand.u32 %v693, 4294901760
        %v695 = vsub.f32 %v693, %v694
        %v696 = vand.u32 %v695, 4294901760
        %697 = vmatprep.subr.mxu0 %v696
        %v698 = vand.u32 %v303, 4294901760
        %v699 = vsub.f32 %v303, %v698
        %v700 = vand.u32 %v699, 4294901760
        %v701 = vsub.f32 %v699, %v700
        %v702 = vand.u32 %v701, 4294901760
        %703 = vmatpush1.msra.mxu0 %v702
        %v704 = vand.u32 %v366, 4294901760
        %v705 = vsub.f32 %v366, %v704
        %v706 = vand.u32 %v705, 4294901760
        %v707 = vsub.f32 %v705, %v706
        %v708 = vand.u32 %v707, 4294901760
        %709 = vmatprep.subr.mxu0 %v708
        %v710 = vand.u32 %v365, 4294901760
        %v711 = vsub.f32 %v365, %v710
        %v712 = vand.u32 %v711, 4294901760
        %v713 = vsub.f32 %v711, %v712
        %v714 = vand.u32 %v713, 4294901760
        %715 = vmatpush2.msra.mxu0 %v714
        %v716 = vand.u32 %v364, 4294901760
        %v717 = vsub.f32 %v364, %v716
        %v718 = vand.u32 %v717, 4294901760
        %v719 = vsub.f32 %v717, %v718
        %v720 = vand.u32 %v719, 4294901760
        %721 = vmatprep.subr.mxu0 %v720
        %v722 = vand.u32 %v363, 4294901760
        %v723 = vsub.f32 %v363, %v722
        %v724 = vand.u32 %v723, 4294901760
        %v725 = vsub.f32 %v723, %v724
        %v726 = vand.u32 %v725, 4294901760
        %727 = vmatpush2.msra.mxu0 %v726
        %v728 = vand.u32 %v362, 4294901760
        %v729 = vsub.f32 %v362, %v728
        %v730 = vand.u32 %v729, 4294901760
        %v731 = vsub.f32 %v729, %v730
        %v732 = vand.u32 %v731, 4294901760
        %733 = vmatprep.subr.mxu0 %v732
        %v734 = vand.u32 %v361, 4294901760
        %v735 = vsub.f32 %v361, %v734
        %v736 = vand.u32 %v735, 4294901760
        %v737 = vsub.f32 %v735, %v736
        %v738 = vand.u32 %v737, 4294901760
        %739 = vmatpush2.msra.mxu0 %v738
        %v740 = vand.u32 %v360, 4294901760
        %v741 = vsub.f32 %v360, %v740
        %v742 = vand.u32 %v741, 4294901760
        %v743 = vsub.f32 %v741, %v742
        %v744 = vand.u32 %v743, 4294901760
        %745 = vmatprep.subr.mxu0 %v744
        %v746 = vand.u32 %v359, 4294901760
        %v747 = vsub.f32 %v359, %v746
        %v748 = vand.u32 %v747, 4294901760
        %v749 = vsub.f32 %v747, %v748
        %v750 = vand.u32 %v749, 4294901760
        %751 = vmatpush2.msra.mxu0 %v750
        %v752 = vand.u32 %v358, 4294901760
        %v753 = vsub.f32 %v358, %v752
        %v754 = vand.u32 %v753, 4294901760
        %v755 = vsub.f32 %v753, %v754
        %v756 = vand.u32 %v755, 4294901760
        %757 = vmatprep.subr.mxu0 %v756
        %v758 = vand.u32 %v357, 4294901760
        %v759 = vsub.f32 %v357, %v758
        %v760 = vand.u32 %v759, 4294901760
        %v761 = vsub.f32 %v759, %v760
        %v762 = vand.u32 %v761, 4294901760
        %763 = vmatpush2.msra.mxu0 %v762
        %v764 = vand.u32 %v356, 4294901760
        %v765 = vsub.f32 %v356, %v764
        %v766 = vand.u32 %v765, 4294901760
        %v767 = vsub.f32 %v765, %v766
        %v768 = vand.u32 %v767, 4294901760
        %769 = vmatprep.subr.mxu0 %v768
        %v770 = vand.u32 %v355, 4294901760
        %v771 = vsub.f32 %v355, %v770
        %v772 = vand.u32 %v771, 4294901760
        %v773 = vsub.f32 %v771, %v772
        %v774 = vand.u32 %v773, 4294901760
        %775 = vmatpush2.msra.mxu0 %v774
        %v776 = vand.u32 %v354, 4294901760
        %v777 = vsub.f32 %v354, %v776
        %v778 = vand.u32 %v777, 4294901760
        %v779 = vsub.f32 %v777, %v778
        %v780 = vand.u32 %v779, 4294901760
        %781 = vmatprep.subr.mxu0 %v780
        %v782 = vand.u32 %v353, 4294901760
        %v783 = vsub.f32 %v353, %v782
        %v784 = vand.u32 %v783, 4294901760
        %v785 = vsub.f32 %v783, %v784
        %v786 = vand.u32 %v785, 4294901760
        %787 = vmatpush2.msra.mxu0 %v786
        %v788 = vand.u32 %v352, 4294901760
        %v789 = vsub.f32 %v352, %v788
        %v790 = vand.u32 %v789, 4294901760
        %v791 = vsub.f32 %v789, %v790
        %v792 = vand.u32 %v791, 4294901760
        %793 = vmatprep.subr.mxu0 %v792
        %v794 = vand.u32 %v351, 4294901760
        %v795 = vsub.f32 %v351, %v794
        %v796 = vand.u32 %v795, 4294901760
        %v797 = vsub.f32 %v795, %v796
        %v798 = vand.u32 %v797, 4294901760
        %799 = vmatpush2.msra.mxu0 %v798
        %v800 = vand.u32 %v350, 4294901760
        %v801 = vsub.f32 %v350, %v800
        %v802 = vand.u32 %v801, 4294901760
        %v803 = vsub.f32 %v801, %v802
        %v804 = vand.u32 %v803, 4294901760
        %805 = vmatprep.subr.mxu0 %v804
        %v806 = vand.u32 %v349, 4294901760
        %v807 = vsub.f32 %v349, %v806
        %v808 = vand.u32 %v807, 4294901760
        %v809 = vsub.f32 %v807, %v808
        %v810 = vand.u32 %v809, 4294901760
        %811 = vmatpush2.msra.mxu0 %v810
        %v812 = vand.u32 %v348, 4294901760
        %v813 = vsub.f32 %v348, %v812
        %v814 = vand.u32 %v813, 4294901760
        %v815 = vsub.f32 %v813, %v814
        %v816 = vand.u32 %v815, 4294901760
        %817 = vmatprep.subr.mxu0 %v816
        %v818 = vand.u32 %v347, 4294901760
        %v819 = vsub.f32 %v347, %v818
        %v820 = vand.u32 %v819, 4294901760
        %v821 = vsub.f32 %v819, %v820
        %v822 = vand.u32 %v821, 4294901760
        %823 = vmatpush2.msra.mxu0 %v822
        %v824 = vand.u32 %v346, 4294901760
        %v825 = vsub.f32 %v346, %v824
        %v826 = vand.u32 %v825, 4294901760
        %v827 = vsub.f32 %v825, %v826
        %v828 = vand.u32 %v827, 4294901760
        %829 = vmatprep.subr.mxu0 %v828
        %v830 = vand.u32 %v345, 4294901760
        %v831 = vsub.f32 %v345, %v830
        %v832 = vand.u32 %v831, 4294901760
        %v833 = vsub.f32 %v831, %v832
        %v834 = vand.u32 %v833, 4294901760
        %835 = vmatpush2.msra.mxu0 %v834
        %v836 = vand.u32 %v344, 4294901760
        %v837 = vsub.f32 %v344, %v836
        %v838 = vand.u32 %v837, 4294901760
        %v839 = vsub.f32 %v837, %v838
        %v840 = vand.u32 %v839, 4294901760
        %841 = vmatprep.subr.mxu0 %v840
        %v842 = vand.u32 %v343, 4294901760
        %v843 = vsub.f32 %v343, %v842
        %v844 = vand.u32 %v843, 4294901760
        %v845 = vsub.f32 %v843, %v844
        %v846 = vand.u32 %v845, 4294901760
        %847 = vmatpush2.msra.mxu0 %v846
        %v848 = vand.u32 %v342, 4294901760
        %v849 = vsub.f32 %v342, %v848
        %v850 = vand.u32 %v849, 4294901760
        %v851 = vsub.f32 %v849, %v850
        %v852 = vand.u32 %v851, 4294901760
        %853 = vmatprep.subr.mxu0 %v852
        %v854 = vand.u32 %v341, 4294901760
        %v855 = vsub.f32 %v341, %v854
        %v856 = vand.u32 %v855, 4294901760
        %v857 = vsub.f32 %v855, %v856
        %v858 = vand.u32 %v857, 4294901760
        %859 = vmatpush2.msra.mxu0 %v858
        %v860 = vand.u32 %v340, 4294901760
        %v861 = vsub.f32 %v340, %v860
        %v862 = vand.u32 %v861, 4294901760
        %v863 = vsub.f32 %v861, %v862
        %v864 = vand.u32 %v863, 4294901760
        %865 = vmatprep.subr.mxu0 %v864
        %v866 = vand.u32 %v339, 4294901760
        %v867 = vsub.f32 %v339, %v866
        %v868 = vand.u32 %v867, 4294901760
        %v869 = vsub.f32 %v867, %v868
        %v870 = vand.u32 %v869, 4294901760
        %871 = vmatpush2.msra.mxu0 %v870
        %v872 = vand.u32 %v338, 4294901760
        %v873 = vsub.f32 %v338, %v872
        %v874 = vand.u32 %v873, 4294901760
        %v875 = vsub.f32 %v873, %v874
        %v876 = vand.u32 %v875, 4294901760
        %877 = vmatprep.subr.mxu0 %v876
        %v878 = vand.u32 %v337, 4294901760
        %v879 = vsub.f32 %v337, %v878
        %v880 = vand.u32 %v879, 4294901760
        %v881 = vsub.f32 %v879, %v880
        %v882 = vand.u32 %v881, 4294901760
        %883 = vmatpush2.msra.mxu0 %v882
        %v884 = vand.u32 %v336, 4294901760
        %v885 = vsub.f32 %v336, %v884
        %v886 = vand.u32 %v885, 4294901760
        %v887 = vsub.f32 %v885, %v886
        %v888 = vand.u32 %v887, 4294901760
        %889 = vmatprep.subr.mxu0 %v888
        %v890 = vand.u32 %v335, 4294901760
        %v891 = vsub.f32 %v335, %v890
        %v892 = vand.u32 %v891, 4294901760
        %v893 = vsub.f32 %v891, %v892
        %v894 = vand.u32 %v893, 4294901760
        %895 = vmatpush2.msra.mxu0 %v894
        %v896 = vand.u32 %v237, 4294901760
        %897 = vmatprep.mubr.f32.mxu0 %v896
        %v898 = vand.u32 %v236, 4294901760
        %899 = vmatmul.mubr.f32.gmra.mxu0 %v898
        %v900 = vpop.f32.mrf.mxu0
        %v901 = vadd.f32 %v508, %v900
        %v902 = vpop.f32.mrf.mxu0
        %v903 = vadd.f32 %v510, %v902
        %904 = vdwg.mxu0
        %v905 = vand.u32 %v334, 4294901760
        %v906 = vsub.f32 %v334, %v905
        %907 = vmatprep.subr.mxu0 %v906
        %v908 = vand.u32 %v333, 4294901760
        %v909 = vsub.f32 %v333, %v908
        %910 = vmatpush1.msra.mxu0 %v909
        %v911 = vand.u32 %v332, 4294901760
        %v912 = vsub.f32 %v332, %v911
        %913 = vmatprep.subr.mxu0 %v912
        %v914 = vand.u32 %v331, 4294901760
        %v915 = vsub.f32 %v331, %v914
        %916 = vmatpush1.msra.mxu0 %v915
        %v917 = vand.u32 %v330, 4294901760
        %v918 = vsub.f32 %v330, %v917
        %919 = vmatprep.subr.mxu0 %v918
        %v920 = vand.u32 %v329, 4294901760
        %v921 = vsub.f32 %v329, %v920
        %922 = vmatpush1.msra.mxu0 %v921
        %v923 = vand.u32 %v328, 4294901760
        %v924 = vsub.f32 %v328, %v923
        %925 = vmatprep.subr.mxu0 %v924
        %v926 = vand.u32 %v327, 4294901760
        %v927 = vsub.f32 %v327, %v926
        %928 = vmatpush1.msra.mxu0 %v927
        %v929 = vand.u32 %v326, 4294901760
        %v930 = vsub.f32 %v326, %v929
        %931 = vmatprep.subr.mxu0 %v930
        %v932 = vand.u32 %v325, 4294901760
        %v933 = vsub.f32 %v325, %v932
        %934 = vmatpush1.msra.mxu0 %v933
        %v935 = vand.u32 %v324, 4294901760
        %v936 = vsub.f32 %v324, %v935
        %937 = vmatprep.subr.mxu0 %v936
        %v938 = vand.u32 %v323, 4294901760
        %v939 = vsub.f32 %v323, %v938
        %940 = vmatpush1.msra.mxu0 %v939
        %v941 = vand.u32 %v322, 4294901760
        %v942 = vsub.f32 %v322, %v941
        %943 = vmatprep.subr.mxu0 %v942
        %v944 = vand.u32 %v321, 4294901760
        %v945 = vsub.f32 %v321, %v944
        %946 = vmatpush1.msra.mxu0 %v945
        %v947 = vand.u32 %v320, 4294901760
        %v948 = vsub.f32 %v320, %v947
        %949 = vmatprep.subr.mxu0 %v948
        %v950 = vand.u32 %v319, 4294901760
        %v951 = vsub.f32 %v319, %v950
        %952 = vmatpush1.msra.mxu0 %v951
        %v953 = vand.u32 %v318, 4294901760
        %v954 = vsub.f32 %v318, %v953
        %955 = vmatprep.subr.mxu0 %v954
        %v956 = vand.u32 %v317, 4294901760
        %v957 = vsub.f32 %v317, %v956
        %958 = vmatpush1.msra.mxu0 %v957
        %v959 = vand.u32 %v316, 4294901760
        %v960 = vsub.f32 %v316, %v959
        %961 = vmatprep.subr.mxu0 %v960
        %v962 = vand.u32 %v315, 4294901760
        %v963 = vsub.f32 %v315, %v962
        %964 = vmatpush1.msra.mxu0 %v963
        %v965 = vand.u32 %v314, 4294901760
        %v966 = vsub.f32 %v314, %v965
        %967 = vmatprep.subr.mxu0 %v966
        %v968 = vand.u32 %v313, 4294901760
        %v969 = vsub.f32 %v313, %v968
        %970 = vmatpush1.msra.mxu0 %v969
        %v971 = vand.u32 %v312, 4294901760
        %v972 = vsub.f32 %v312, %v971
        %973 = vmatprep.subr.mxu0 %v972
        %v974 = vand.u32 %v311, 4294901760
        %v975 = vsub.f32 %v311, %v974
        %976 = vmatpush1.msra.mxu0 %v975
        %v977 = vand.u32 %v310, 4294901760
        %v978 = vsub.f32 %v310, %v977
        %979 = vmatprep.subr.mxu0 %v978
        %v980 = vand.u32 %v309, 4294901760
        %v981 = vsub.f32 %v309, %v980
        %982 = vmatpush1.msra.mxu0 %v981
        %v983 = vand.u32 %v308, 4294901760
        %v984 = vsub.f32 %v308, %v983
        %985 = vmatprep.subr.mxu0 %v984
        %v986 = vand.u32 %v307, 4294901760
        %v987 = vsub.f32 %v307, %v986
        %988 = vmatpush1.msra.mxu0 %v987
        %v989 = vand.u32 %v306, 4294901760
        %v990 = vsub.f32 %v306, %v989
        %991 = vmatprep.subr.mxu0 %v990
        %v992 = vand.u32 %v305, 4294901760
        %v993 = vsub.f32 %v305, %v992
        %994 = vmatpush1.msra.mxu0 %v993
        %v995 = vand.u32 %v304, 4294901760
        %v996 = vsub.f32 %v304, %v995
        %997 = vmatprep.subr.mxu0 %v996
        %v998 = vand.u32 %v303, 4294901760
        %v999 = vsub.f32 %v303, %v998
        %1000 = vmatpush1.msra.mxu0 %v999
        %v1001 = vand.u32 %v366, 4294901760
        %v1002 = vsub.f32 %v366, %v1001
        %1003 = vmatprep.subr.mxu0 %v1002
        %v1004 = vand.u32 %v365, 4294901760
        %v1005 = vsub.f32 %v365, %v1004
        %1006 = vmatpush2.msra.mxu0 %v1005
        %v1007 = vand.u32 %v364, 4294901760
        %v1008 = vsub.f32 %v364, %v1007
        %1009 = vmatprep.subr.mxu0 %v1008
        %v1010 = vand.u32 %v363, 4294901760
        %v1011 = vsub.f32 %v363, %v1010
        %1012 = vmatpush2.msra.mxu0 %v1011
        %v1013 = vand.u32 %v362, 4294901760
        %v1014 = vsub.f32 %v362, %v1013
        %1015 = vmatprep.subr.mxu0 %v1014
        %v1016 = vand.u32 %v361, 4294901760
        %v1017 = vsub.f32 %v361, %v1016
        %1018 = vmatpush2.msra.mxu0 %v1017
        %v1019 = vand.u32 %v360, 4294901760
        %v1020 = vsub.f32 %v360, %v1019
        %1021 = vmatprep.subr.mxu0 %v1020
        %v1022 = vand.u32 %v359, 4294901760
        %v1023 = vsub.f32 %v359, %v1022
        %1024 = vmatpush2.msra.mxu0 %v1023
        %v1025 = vand.u32 %v358, 4294901760
        %v1026 = vsub.f32 %v358, %v1025
        %1027 = vmatprep.subr.mxu0 %v1026
        %v1028 = vand.u32 %v357, 4294901760
        %v1029 = vsub.f32 %v357, %v1028
        %1030 = vmatpush2.msra.mxu0 %v1029
        %v1031 = vand.u32 %v356, 4294901760
        %v1032 = vsub.f32 %v356, %v1031
        %1033 = vmatprep.subr.mxu0 %v1032
        %v1034 = vand.u32 %v355, 4294901760
        %v1035 = vsub.f32 %v355, %v1034
        %1036 = vmatpush2.msra.mxu0 %v1035
        %v1037 = vand.u32 %v354, 4294901760
        %v1038 = vsub.f32 %v354, %v1037
        %1039 = vmatprep.subr.mxu0 %v1038
        %v1040 = vand.u32 %v353, 4294901760
        %v1041 = vsub.f32 %v353, %v1040
        %1042 = vmatpush2.msra.mxu0 %v1041
        %v1043 = vand.u32 %v352, 4294901760
        %v1044 = vsub.f32 %v352, %v1043
        %1045 = vmatprep.subr.mxu0 %v1044
        %v1046 = vand.u32 %v351, 4294901760
        %v1047 = vsub.f32 %v351, %v1046
        %1048 = vmatpush2.msra.mxu0 %v1047
        %v1049 = vand.u32 %v350, 4294901760
        %v1050 = vsub.f32 %v350, %v1049
        %1051 = vmatprep.subr.mxu0 %v1050
        %v1052 = vand.u32 %v349, 4294901760
        %v1053 = vsub.f32 %v349, %v1052
        %1054 = vmatpush2.msra.mxu0 %v1053
        %v1055 = vand.u32 %v348, 4294901760
        %v1056 = vsub.f32 %v348, %v1055
        %1057 = vmatprep.subr.mxu0 %v1056
        %v1058 = vand.u32 %v347, 4294901760
        %v1059 = vsub.f32 %v347, %v1058
        %1060 = vmatpush2.msra.mxu0 %v1059
        %v1061 = vand.u32 %v346, 4294901760
        %v1062 = vsub.f32 %v346, %v1061
        %1063 = vmatprep.subr.mxu0 %v1062
        %v1064 = vand.u32 %v345, 4294901760
        %v1065 = vsub.f32 %v345, %v1064
        %1066 = vmatpush2.msra.mxu0 %v1065
        %v1067 = vand.u32 %v344, 4294901760
        %v1068 = vsub.f32 %v344, %v1067
        %1069 = vmatprep.subr.mxu0 %v1068
        %v1070 = vand.u32 %v343, 4294901760
        %v1071 = vsub.f32 %v343, %v1070
        %1072 = vmatpush2.msra.mxu0 %v1071
        %v1073 = vand.u32 %v342, 4294901760
        %v1074 = vsub.f32 %v342, %v1073
        %1075 = vmatprep.subr.mxu0 %v1074
        %v1076 = vand.u32 %v341, 4294901760
        %v1077 = vsub.f32 %v341, %v1076
        %1078 = vmatpush2.msra.mxu0 %v1077
        %v1079 = vand.u32 %v340, 4294901760
        %v1080 = vsub.f32 %v340, %v1079
        %1081 = vmatprep.subr.mxu0 %v1080
        %v1082 = vand.u32 %v339, 4294901760
        %v1083 = vsub.f32 %v339, %v1082
        %1084 = vmatpush2.msra.mxu0 %v1083
        %v1085 = vand.u32 %v338, 4294901760
        %v1086 = vsub.f32 %v338, %v1085
        %1087 = vmatprep.subr.mxu0 %v1086
        %v1088 = vand.u32 %v337, 4294901760
        %v1089 = vsub.f32 %v337, %v1088
        %1090 = vmatpush2.msra.mxu0 %v1089
        %v1091 = vand.u32 %v336, 4294901760
        %v1092 = vsub.f32 %v336, %v1091
        %1093 = vmatprep.subr.mxu0 %v1092
        %v1094 = vand.u32 %v335, 4294901760
        %v1095 = vsub.f32 %v335, %v1094
        %1096 = vmatpush2.msra.mxu0 %v1095
        %v1097 = vand.u32 %v237, 4294901760
        %v1098 = vsub.f32 %v237, %v1097
        %1099 = vmatprep.mubr.f32.mxu0 %v1098
        %v1100 = vand.u32 %v236, 4294901760
        %v1101 = vsub.f32 %v236, %v1100
        %1102 = vmatmul.mubr.f32.gmra.mxu0 %v1101
        %v1103 = vpop.f32.mrf.mxu0
        %v1104 = vadd.f32 %v901, %v1103
        %v1105 = vpop.f32.mrf.mxu0
        %v1106 = vadd.f32 %v903, %v1105
        %1107 = vdwg.mxu0
        %v1108 = vand.u32 %v334, 4294901760
        %1109 = vmatprep.subr.mxu0 %v1108
        %v1110 = vand.u32 %v333, 4294901760
        %1111 = vmatpush1.msra.mxu0 %v1110
        %v1112 = vand.u32 %v332, 4294901760
        %1113 = vmatprep.subr.mxu0 %v1112
        %v1114 = vand.u32 %v331, 4294901760
        %1115 = vmatpush1.msra.mxu0 %v1114
        %v1116 = vand.u32 %v330, 4294901760
        %1117 = vmatprep.subr.mxu0 %v1116
        %v1118 = vand.u32 %v329, 4294901760
        %1119 = vmatpush1.msra.mxu0 %v1118
        %v1120 = vand.u32 %v328, 4294901760
        %1121 = vmatprep.subr.mxu0 %v1120
        %v1122 = vand.u32 %v327, 4294901760
        %1123 = vmatpush1.msra.mxu0 %v1122
        %v1124 = vand.u32 %v326, 4294901760
        %1125 = vmatprep.subr.mxu0 %v1124
        %v1126 = vand.u32 %v325, 4294901760
        %1127 = vmatpush1.msra.mxu0 %v1126
        %v1128 = vand.u32 %v324, 4294901760
        %1129 = vmatprep.subr.mxu0 %v1128
        %v1130 = vand.u32 %v323, 4294901760
        %1131 = vmatpush1.msra.mxu0 %v1130
        %v1132 = vand.u32 %v322, 4294901760
        %1133 = vmatprep.subr.mxu0 %v1132
        %v1134 = vand.u32 %v321, 4294901760
        %1135 = vmatpush1.msra.mxu0 %v1134
        %v1136 = vand.u32 %v320, 4294901760
        %1137 = vmatprep.subr.mxu0 %v1136
        %v1138 = vand.u32 %v319, 4294901760
        %1139 = vmatpush1.msra.mxu0 %v1138
        %v1140 = vand.u32 %v318, 4294901760
        %1141 = vmatprep.subr.mxu0 %v1140
        %v1142 = vand.u32 %v317, 4294901760
        %1143 = vmatpush1.msra.mxu0 %v1142
        %v1144 = vand.u32 %v316, 4294901760
        %1145 = vmatprep.subr.mxu0 %v1144
        %v1146 = vand.u32 %v315, 4294901760
        %1147 = vmatpush1.msra.mxu0 %v1146
        %v1148 = vand.u32 %v314, 4294901760
        %1149 = vmatprep.subr.mxu0 %v1148
        %v1150 = vand.u32 %v313, 4294901760
        %1151 = vmatpush1.msra.mxu0 %v1150
        %v1152 = vand.u32 %v312, 4294901760
        %1153 = vmatprep.subr.mxu0 %v1152
        %v1154 = vand.u32 %v311, 4294901760
        %1155 = vmatpush1.msra.mxu0 %v1154
        %v1156 = vand.u32 %v310, 4294901760
        %1157 = vmatprep.subr.mxu0 %v1156
        %v1158 = vand.u32 %v309, 4294901760
        %1159 = vmatpush1.msra.mxu0 %v1158
        %v1160 = vand.u32 %v308, 4294901760
        %1161 = vmatprep.subr.mxu0 %v1160
        %v1162 = vand.u32 %v307, 4294901760
        %1163 = vmatpush1.msra.mxu0 %v1162
        %v1164 = vand.u32 %v306, 4294901760
        %1165 = vmatprep.subr.mxu0 %v1164
        %v1166 = vand.u32 %v305, 4294901760
        %1167 = vmatpush1.msra.mxu0 %v1166
        %v1168 = vand.u32 %v304, 4294901760
        %1169 = vmatprep.subr.mxu0 %v1168
        %v1170 = vand.u32 %v303, 4294901760
        %1171 = vmatpush1.msra.mxu0 %v1170
        %v1172 = vand.u32 %v366, 4294901760
        %1173 = vmatprep.subr.mxu0 %v1172
        %v1174 = vand.u32 %v365, 4294901760
        %1175 = vmatpush2.msra.mxu0 %v1174
        %v1176 = vand.u32 %v364, 4294901760
        %1177 = vmatprep.subr.mxu0 %v1176
        %v1178 = vand.u32 %v363, 4294901760
        %1179 = vmatpush2.msra.mxu0 %v1178
        %v1180 = vand.u32 %v362, 4294901760
        %1181 = vmatprep.subr.mxu0 %v1180
        %v1182 = vand.u32 %v361, 4294901760
        %1183 = vmatpush2.msra.mxu0 %v1182
        %v1184 = vand.u32 %v360, 4294901760
        %1185 = vmatprep.subr.mxu0 %v1184
        %v1186 = vand.u32 %v359, 4294901760
        %1187 = vmatpush2.msra.mxu0 %v1186
        %v1188 = vand.u32 %v358, 4294901760
        %1189 = vmatprep.subr.mxu0 %v1188
        %v1190 = vand.u32 %v357, 4294901760
        %1191 = vmatpush2.msra.mxu0 %v1190
        %v1192 = vand.u32 %v356, 4294901760
        %1193 = vmatprep.subr.mxu0 %v1192
        %v1194 = vand.u32 %v355, 4294901760
        %1195 = vmatpush2.msra.mxu0 %v1194
        %v1196 = vand.u32 %v354, 4294901760
        %1197 = vmatprep.subr.mxu0 %v1196
        %v1198 = vand.u32 %v353, 4294901760
        %1199 = vmatpush2.msra.mxu0 %v1198
        %v1200 = vand.u32 %v352, 4294901760
        %1201 = vmatprep.subr.mxu0 %v1200
        %v1202 = vand.u32 %v351, 4294901760
        %1203 = vmatpush2.msra.mxu0 %v1202
        %v1204 = vand.u32 %v350, 4294901760
        %1205 = vmatprep.subr.mxu0 %v1204
        %v1206 = vand.u32 %v349, 4294901760
        %1207 = vmatpush2.msra.mxu0 %v1206
        %v1208 = vand.u32 %v348, 4294901760
        %1209 = vmatprep.subr.mxu0 %v1208
        %v1210 = vand.u32 %v347, 4294901760
        %1211 = vmatpush2.msra.mxu0 %v1210
        %v1212 = vand.u32 %v346, 4294901760
        %1213 = vmatprep.subr.mxu0 %v1212
        %v1214 = vand.u32 %v345, 4294901760
        %1215 = vmatpush2.msra.mxu0 %v1214
        %v1216 = vand.u32 %v344, 4294901760
        %1217 = vmatprep.subr.mxu0 %v1216
        %v1218 = vand.u32 %v343, 4294901760
        %1219 = vmatpush2.msra.mxu0 %v1218
        %v1220 = vand.u32 %v342, 4294901760
        %1221 = vmatprep.subr.mxu0 %v1220
        %v1222 = vand.u32 %v341, 4294901760
        %1223 = vmatpush2.msra.mxu0 %v1222
        %v1224 = vand.u32 %v340, 4294901760
        %1225 = vmatprep.subr.mxu0 %v1224
        %v1226 = vand.u32 %v339, 4294901760
        %1227 = vmatpush2.msra.mxu0 %v1226
        %v1228 = vand.u32 %v338, 4294901760
        %1229 = vmatprep.subr.mxu0 %v1228
        %v1230 = vand.u32 %v337, 4294901760
        %1231 = vmatpush2.msra.mxu0 %v1230
        %v1232 = vand.u32 %v336, 4294901760
        %1233 = vmatprep.subr.mxu0 %v1232
        %v1234 = vand.u32 %v335, 4294901760
        %1235 = vmatpush2.msra.mxu0 %v1234
        %v1236 = vand.u32 %v237, 4294901760
        %v1237 = vsub.f32 %v237, %v1236
        %v1238 = vand.u32 %v1237, 4294901760
        %1239 = vmatprep.mubr.f32.mxu0 %v1238
        %v1240 = vand.u32 %v236, 4294901760
        %v1241 = vsub.f32 %v236, %v1240
        %v1242 = vand.u32 %v1241, 4294901760
        %1243 = vmatmul.mubr.f32.gmra.mxu0 %v1242
        %v1244 = vpop.f32.mrf.mxu0
        %v1245 = vadd.f32 %v1104, %v1244
        %v1246 = vpop.f32.mrf.mxu0
        %v1247 = vadd.f32 %v1106, %v1246
        %1248 = vdwg.mxu0
        %v1249 = vand.u32 %v334, 4294901760
        %v1250 = vsub.f32 %v334, %v1249
        %v1251 = vand.u32 %v1250, 4294901760
        %1252 = vmatprep.subr.mxu0 %v1251
        %v1253 = vand.u32 %v333, 4294901760
        %v1254 = vsub.f32 %v333, %v1253
        %v1255 = vand.u32 %v1254, 4294901760
        %1256 = vmatpush1.msra.mxu0 %v1255
        %v1257 = vand.u32 %v332, 4294901760
        %v1258 = vsub.f32 %v332, %v1257
        %v1259 = vand.u32 %v1258, 4294901760
        %1260 = vmatprep.subr.mxu0 %v1259
        %v1261 = vand.u32 %v331, 4294901760
        %v1262 = vsub.f32 %v331, %v1261
        %v1263 = vand.u32 %v1262, 4294901760
        %1264 = vmatpush1.msra.mxu0 %v1263
        %v1265 = vand.u32 %v330, 4294901760
        %v1266 = vsub.f32 %v330, %v1265
        %v1267 = vand.u32 %v1266, 4294901760
        %1268 = vmatprep.subr.mxu0 %v1267
        %v1269 = vand.u32 %v329, 4294901760
        %v1270 = vsub.f32 %v329, %v1269
        %v1271 = vand.u32 %v1270, 4294901760
        %1272 = vmatpush1.msra.mxu0 %v1271
        %v1273 = vand.u32 %v328, 4294901760
        %v1274 = vsub.f32 %v328, %v1273
        %v1275 = vand.u32 %v1274, 4294901760
        %1276 = vmatprep.subr.mxu0 %v1275
        %v1277 = vand.u32 %v327, 4294901760
        %v1278 = vsub.f32 %v327, %v1277
        %v1279 = vand.u32 %v1278, 4294901760
        %1280 = vmatpush1.msra.mxu0 %v1279
        %v1281 = vand.u32 %v326, 4294901760
        %v1282 = vsub.f32 %v326, %v1281
        %v1283 = vand.u32 %v1282, 4294901760
        %1284 = vmatprep.subr.mxu0 %v1283
        %v1285 = vand.u32 %v325, 4294901760
        %v1286 = vsub.f32 %v325, %v1285
        %v1287 = vand.u32 %v1286, 4294901760
        %1288 = vmatpush1.msra.mxu0 %v1287
        %v1289 = vand.u32 %v324, 4294901760
        %v1290 = vsub.f32 %v324, %v1289
        %v1291 = vand.u32 %v1290, 4294901760
        %1292 = vmatprep.subr.mxu0 %v1291
        %v1293 = vand.u32 %v323, 4294901760
        %v1294 = vsub.f32 %v323, %v1293
        %v1295 = vand.u32 %v1294, 4294901760
        %1296 = vmatpush1.msra.mxu0 %v1295
        %v1297 = vand.u32 %v322, 4294901760
        %v1298 = vsub.f32 %v322, %v1297
        %v1299 = vand.u32 %v1298, 4294901760
        %1300 = vmatprep.subr.mxu0 %v1299
        %v1301 = vand.u32 %v321, 4294901760
        %v1302 = vsub.f32 %v321, %v1301
        %v1303 = vand.u32 %v1302, 4294901760
        %1304 = vmatpush1.msra.mxu0 %v1303
        %v1305 = vand.u32 %v320, 4294901760
        %v1306 = vsub.f32 %v320, %v1305
        %v1307 = vand.u32 %v1306, 4294901760
        %1308 = vmatprep.subr.mxu0 %v1307
        %v1309 = vand.u32 %v319, 4294901760
        %v1310 = vsub.f32 %v319, %v1309
        %v1311 = vand.u32 %v1310, 4294901760
        %1312 = vmatpush1.msra.mxu0 %v1311
        %v1313 = vand.u32 %v318, 4294901760
        %v1314 = vsub.f32 %v318, %v1313
        %v1315 = vand.u32 %v1314, 4294901760
        %1316 = vmatprep.subr.mxu0 %v1315
        %v1317 = vand.u32 %v317, 4294901760
        %v1318 = vsub.f32 %v317, %v1317
        %v1319 = vand.u32 %v1318, 4294901760
        %1320 = vmatpush1.msra.mxu0 %v1319
        %v1321 = vand.u32 %v316, 4294901760
        %v1322 = vsub.f32 %v316, %v1321
        %v1323 = vand.u32 %v1322, 4294901760
        %1324 = vmatprep.subr.mxu0 %v1323
        %v1325 = vand.u32 %v315, 4294901760
        %v1326 = vsub.f32 %v315, %v1325
        %v1327 = vand.u32 %v1326, 4294901760
        %1328 = vmatpush1.msra.mxu0 %v1327
        %v1329 = vand.u32 %v314, 4294901760
        %v1330 = vsub.f32 %v314, %v1329
        %v1331 = vand.u32 %v1330, 4294901760
        %1332 = vmatprep.subr.mxu0 %v1331
        %v1333 = vand.u32 %v313, 4294901760
        %v1334 = vsub.f32 %v313, %v1333
        %v1335 = vand.u32 %v1334, 4294901760
        %1336 = vmatpush1.msra.mxu0 %v1335
        %v1337 = vand.u32 %v312, 4294901760
        %v1338 = vsub.f32 %v312, %v1337
        %v1339 = vand.u32 %v1338, 4294901760
        %1340 = vmatprep.subr.mxu0 %v1339
        %v1341 = vand.u32 %v311, 4294901760
        %v1342 = vsub.f32 %v311, %v1341
        %v1343 = vand.u32 %v1342, 4294901760
        %1344 = vmatpush1.msra.mxu0 %v1343
        %v1345 = vand.u32 %v310, 4294901760
        %v1346 = vsub.f32 %v310, %v1345
        %v1347 = vand.u32 %v1346, 4294901760
        %1348 = vmatprep.subr.mxu0 %v1347
        %v1349 = vand.u32 %v309, 4294901760
        %v1350 = vsub.f32 %v309, %v1349
        %v1351 = vand.u32 %v1350, 4294901760
        %1352 = vmatpush1.msra.mxu0 %v1351
        %v1353 = vand.u32 %v308, 4294901760
        %v1354 = vsub.f32 %v308, %v1353
        %v1355 = vand.u32 %v1354, 4294901760
        %1356 = vmatprep.subr.mxu0 %v1355
        %v1357 = vand.u32 %v307, 4294901760
        %v1358 = vsub.f32 %v307, %v1357
        %v1359 = vand.u32 %v1358, 4294901760
        %1360 = vmatpush1.msra.mxu0 %v1359
        %v1361 = vand.u32 %v306, 4294901760
        %v1362 = vsub.f32 %v306, %v1361
        %v1363 = vand.u32 %v1362, 4294901760
        %1364 = vmatprep.subr.mxu0 %v1363
        %v1365 = vand.u32 %v305, 4294901760
        %v1366 = vsub.f32 %v305, %v1365
        %v1367 = vand.u32 %v1366, 4294901760
        %1368 = vmatpush1.msra.mxu0 %v1367
        %v1369 = vand.u32 %v304, 4294901760
        %v1370 = vsub.f32 %v304, %v1369
        %v1371 = vand.u32 %v1370, 4294901760
        %1372 = vmatprep.subr.mxu0 %v1371
        %v1373 = vand.u32 %v303, 4294901760
        %v1374 = vsub.f32 %v303, %v1373
        %v1375 = vand.u32 %v1374, 4294901760
        %1376 = vmatpush1.msra.mxu0 %v1375
        %v1377 = vand.u32 %v366, 4294901760
        %v1378 = vsub.f32 %v366, %v1377
        %v1379 = vand.u32 %v1378, 4294901760
        %1380 = vmatprep.subr.mxu0 %v1379
        %v1381 = vand.u32 %v365, 4294901760
        %v1382 = vsub.f32 %v365, %v1381
        %v1383 = vand.u32 %v1382, 4294901760
        %1384 = vmatpush2.msra.mxu0 %v1383
        %v1385 = vand.u32 %v364, 4294901760
        %v1386 = vsub.f32 %v364, %v1385
        %v1387 = vand.u32 %v1386, 4294901760
        %1388 = vmatprep.subr.mxu0 %v1387
        %v1389 = vand.u32 %v363, 4294901760
        %v1390 = vsub.f32 %v363, %v1389
        %v1391 = vand.u32 %v1390, 4294901760
        %1392 = vmatpush2.msra.mxu0 %v1391
        %v1393 = vand.u32 %v362, 4294901760
        %v1394 = vsub.f32 %v362, %v1393
        %v1395 = vand.u32 %v1394, 4294901760
        %1396 = vmatprep.subr.mxu0 %v1395
        %v1397 = vand.u32 %v361, 4294901760
        %v1398 = vsub.f32 %v361, %v1397
        %v1399 = vand.u32 %v1398, 4294901760
        %1400 = vmatpush2.msra.mxu0 %v1399
        %v1401 = vand.u32 %v360, 4294901760
        %v1402 = vsub.f32 %v360, %v1401
        %v1403 = vand.u32 %v1402, 4294901760
        %1404 = vmatprep.subr.mxu0 %v1403
        %v1405 = vand.u32 %v359, 4294901760
        %v1406 = vsub.f32 %v359, %v1405
        %v1407 = vand.u32 %v1406, 4294901760
        %1408 = vmatpush2.msra.mxu0 %v1407
        %v1409 = vand.u32 %v358, 4294901760
        %v1410 = vsub.f32 %v358, %v1409
        %v1411 = vand.u32 %v1410, 4294901760
        %1412 = vmatprep.subr.mxu0 %v1411
        %v1413 = vand.u32 %v357, 4294901760
        %v1414 = vsub.f32 %v357, %v1413
        %v1415 = vand.u32 %v1414, 4294901760
        %1416 = vmatpush2.msra.mxu0 %v1415
        %v1417 = vand.u32 %v356, 4294901760
        %v1418 = vsub.f32 %v356, %v1417
        %v1419 = vand.u32 %v1418, 4294901760
        %1420 = vmatprep.subr.mxu0 %v1419
        %v1421 = vand.u32 %v355, 4294901760
        %v1422 = vsub.f32 %v355, %v1421
        %v1423 = vand.u32 %v1422, 4294901760
        %1424 = vmatpush2.msra.mxu0 %v1423
        %v1425 = vand.u32 %v354, 4294901760
        %v1426 = vsub.f32 %v354, %v1425
        %v1427 = vand.u32 %v1426, 4294901760
        %1428 = vmatprep.subr.mxu0 %v1427
        %v1429 = vand.u32 %v353, 4294901760
        %v1430 = vsub.f32 %v353, %v1429
        %v1431 = vand.u32 %v1430, 4294901760
        %1432 = vmatpush2.msra.mxu0 %v1431
        %v1433 = vand.u32 %v352, 4294901760
        %v1434 = vsub.f32 %v352, %v1433
        %v1435 = vand.u32 %v1434, 4294901760
        %1436 = vmatprep.subr.mxu0 %v1435
        %v1437 = vand.u32 %v351, 4294901760
        %v1438 = vsub.f32 %v351, %v1437
        %v1439 = vand.u32 %v1438, 4294901760
        %1440 = vmatpush2.msra.mxu0 %v1439
        %v1441 = vand.u32 %v350, 4294901760
        %v1442 = vsub.f32 %v350, %v1441
        %v1443 = vand.u32 %v1442, 4294901760
        %1444 = vmatprep.subr.mxu0 %v1443
        %v1445 = vand.u32 %v349, 4294901760
        %v1446 = vsub.f32 %v349, %v1445
        %v1447 = vand.u32 %v1446, 4294901760
        %1448 = vmatpush2.msra.mxu0 %v1447
        %v1449 = vand.u32 %v348, 4294901760
        %v1450 = vsub.f32 %v348, %v1449
        %v1451 = vand.u32 %v1450, 4294901760
        %1452 = vmatprep.subr.mxu0 %v1451
        %v1453 = vand.u32 %v347, 4294901760
        %v1454 = vsub.f32 %v347, %v1453
        %v1455 = vand.u32 %v1454, 4294901760
        %1456 = vmatpush2.msra.mxu0 %v1455
        %v1457 = vand.u32 %v346, 4294901760
        %v1458 = vsub.f32 %v346, %v1457
        %v1459 = vand.u32 %v1458, 4294901760
        %1460 = vmatprep.subr.mxu0 %v1459
        %v1461 = vand.u32 %v345, 4294901760
        %v1462 = vsub.f32 %v345, %v1461
        %v1463 = vand.u32 %v1462, 4294901760
        %1464 = vmatpush2.msra.mxu0 %v1463
        %v1465 = vand.u32 %v344, 4294901760
        %v1466 = vsub.f32 %v344, %v1465
        %v1467 = vand.u32 %v1466, 4294901760
        %1468 = vmatprep.subr.mxu0 %v1467
        %v1469 = vand.u32 %v343, 4294901760
        %v1470 = vsub.f32 %v343, %v1469
        %v1471 = vand.u32 %v1470, 4294901760
        %1472 = vmatpush2.msra.mxu0 %v1471
        %v1473 = vand.u32 %v342, 4294901760
        %v1474 = vsub.f32 %v342, %v1473
        %v1475 = vand.u32 %v1474, 4294901760
        %1476 = vmatprep.subr.mxu0 %v1475
        %v1477 = vand.u32 %v341, 4294901760
        %v1478 = vsub.f32 %v341, %v1477
        %v1479 = vand.u32 %v1478, 4294901760
        %1480 = vmatpush2.msra.mxu0 %v1479
        %v1481 = vand.u32 %v340, 4294901760
        %v1482 = vsub.f32 %v340, %v1481
        %v1483 = vand.u32 %v1482, 4294901760
        %1484 = vmatprep.subr.mxu0 %v1483
        %v1485 = vand.u32 %v339, 4294901760
        %v1486 = vsub.f32 %v339, %v1485
        %v1487 = vand.u32 %v1486, 4294901760
        %1488 = vmatpush2.msra.mxu0 %v1487
        %v1489 = vand.u32 %v338, 4294901760
        %v1490 = vsub.f32 %v338, %v1489
        %v1491 = vand.u32 %v1490, 4294901760
        %1492 = vmatprep.subr.mxu0 %v1491
        %v1493 = vand.u32 %v337, 4294901760
        %v1494 = vsub.f32 %v337, %v1493
        %v1495 = vand.u32 %v1494, 4294901760
        %1496 = vmatpush2.msra.mxu0 %v1495
        %v1497 = vand.u32 %v336, 4294901760
        %v1498 = vsub.f32 %v336, %v1497
        %v1499 = vand.u32 %v1498, 4294901760
        %1500 = vmatprep.subr.mxu0 %v1499
        %v1501 = vand.u32 %v335, 4294901760
        %v1502 = vsub.f32 %v335, %v1501
        %v1503 = vand.u32 %v1502, 4294901760
        %1504 = vmatpush2.msra.mxu0 %v1503
        %v1505 = vand.u32 %v237, 4294901760
        %1506 = vmatprep.mubr.f32.mxu0 %v1505
        %v1507 = vand.u32 %v236, 4294901760
        %1508 = vmatmul.mubr.f32.gmra.mxu0 %v1507
        %v1509 = vpop.f32.mrf.mxu0
        %v1510 = vadd.f32 %v1245, %v1509
        %v1511 = vpop.f32.mrf.mxu0
        %v1512 = vadd.f32 %v1247, %v1511
        %1513 = vdwg.mxu0
        %v1514 = vand.u32 %v334, 4294901760
        %1515 = vmatprep.subr.mxu0 %v1514
        %v1516 = vand.u32 %v333, 4294901760
        %1517 = vmatpush1.msra.mxu0 %v1516
        %v1518 = vand.u32 %v332, 4294901760
        %1519 = vmatprep.subr.mxu0 %v1518
        %v1520 = vand.u32 %v331, 4294901760
        %1521 = vmatpush1.msra.mxu0 %v1520
        %v1522 = vand.u32 %v330, 4294901760
        %1523 = vmatprep.subr.mxu0 %v1522
        %v1524 = vand.u32 %v329, 4294901760
        %1525 = vmatpush1.msra.mxu0 %v1524
        %v1526 = vand.u32 %v328, 4294901760
        %1527 = vmatprep.subr.mxu0 %v1526
        %v1528 = vand.u32 %v327, 4294901760
        %1529 = vmatpush1.msra.mxu0 %v1528
        %v1530 = vand.u32 %v326, 4294901760
        %1531 = vmatprep.subr.mxu0 %v1530
        %v1532 = vand.u32 %v325, 4294901760
        %1533 = vmatpush1.msra.mxu0 %v1532
        %v1534 = vand.u32 %v324, 4294901760
        %1535 = vmatprep.subr.mxu0 %v1534
        %v1536 = vand.u32 %v323, 4294901760
        %1537 = vmatpush1.msra.mxu0 %v1536
        %v1538 = vand.u32 %v322, 4294901760
        %1539 = vmatprep.subr.mxu0 %v1538
        %v1540 = vand.u32 %v321, 4294901760
        %1541 = vmatpush1.msra.mxu0 %v1540
        %v1542 = vand.u32 %v320, 4294901760
        %1543 = vmatprep.subr.mxu0 %v1542
        %v1544 = vand.u32 %v319, 4294901760
        %1545 = vmatpush1.msra.mxu0 %v1544
        %v1546 = vand.u32 %v318, 4294901760
        %1547 = vmatprep.subr.mxu0 %v1546
        %v1548 = vand.u32 %v317, 4294901760
        %1549 = vmatpush1.msra.mxu0 %v1548
        %v1550 = vand.u32 %v316, 4294901760
        %1551 = vmatprep.subr.mxu0 %v1550
        %v1552 = vand.u32 %v315, 4294901760
        %1553 = vmatpush1.msra.mxu0 %v1552
        %v1554 = vand.u32 %v314, 4294901760
        %1555 = vmatprep.subr.mxu0 %v1554
        %v1556 = vand.u32 %v313, 4294901760
        %1557 = vmatpush1.msra.mxu0 %v1556
        %v1558 = vand.u32 %v312, 4294901760
        %1559 = vmatprep.subr.mxu0 %v1558
        %v1560 = vand.u32 %v311, 4294901760
        %1561 = vmatpush1.msra.mxu0 %v1560
        %v1562 = vand.u32 %v310, 4294901760
        %1563 = vmatprep.subr.mxu0 %v1562
        %v1564 = vand.u32 %v309, 4294901760
        %1565 = vmatpush1.msra.mxu0 %v1564
        %v1566 = vand.u32 %v308, 4294901760
        %1567 = vmatprep.subr.mxu0 %v1566
        %v1568 = vand.u32 %v307, 4294901760
        %1569 = vmatpush1.msra.mxu0 %v1568
        %v1570 = vand.u32 %v306, 4294901760
        %1571 = vmatprep.subr.mxu0 %v1570
        %v1572 = vand.u32 %v305, 4294901760
        %1573 = vmatpush1.msra.mxu0 %v1572
        %v1574 = vand.u32 %v304, 4294901760
        %1575 = vmatprep.subr.mxu0 %v1574
        %v1576 = vand.u32 %v303, 4294901760
        %1577 = vmatpush1.msra.mxu0 %v1576
        %v1578 = vand.u32 %v366, 4294901760
        %1579 = vmatprep.subr.mxu0 %v1578
        %v1580 = vand.u32 %v365, 4294901760
        %1581 = vmatpush2.msra.mxu0 %v1580
        %v1582 = vand.u32 %v364, 4294901760
        %1583 = vmatprep.subr.mxu0 %v1582
        %v1584 = vand.u32 %v363, 4294901760
        %1585 = vmatpush2.msra.mxu0 %v1584
        %v1586 = vand.u32 %v362, 4294901760
        %1587 = vmatprep.subr.mxu0 %v1586
        %v1588 = vand.u32 %v361, 4294901760
        %1589 = vmatpush2.msra.mxu0 %v1588
        %v1590 = vand.u32 %v360, 4294901760
        %1591 = vmatprep.subr.mxu0 %v1590
        %v1592 = vand.u32 %v359, 4294901760
        %1593 = vmatpush2.msra.mxu0 %v1592
        %v1594 = vand.u32 %v358, 4294901760
        %1595 = vmatprep.subr.mxu0 %v1594
        %v1596 = vand.u32 %v357, 4294901760
        %1597 = vmatpush2.msra.mxu0 %v1596
        %v1598 = vand.u32 %v356, 4294901760
        %1599 = vmatprep.subr.mxu0 %v1598
        %v1600 = vand.u32 %v355, 4294901760
        %1601 = vmatpush2.msra.mxu0 %v1600
        %v1602 = vand.u32 %v354, 4294901760
        %1603 = vmatprep.subr.mxu0 %v1602
        %v1604 = vand.u32 %v353, 4294901760
        %1605 = vmatpush2.msra.mxu0 %v1604
        %v1606 = vand.u32 %v352, 4294901760
        %1607 = vmatprep.subr.mxu0 %v1606
        %v1608 = vand.u32 %v351, 4294901760
        %1609 = vmatpush2.msra.mxu0 %v1608
        %v1610 = vand.u32 %v350, 4294901760
        %1611 = vmatprep.subr.mxu0 %v1610
        %v1612 = vand.u32 %v349, 4294901760
        %1613 = vmatpush2.msra.mxu0 %v1612
        %v1614 = vand.u32 %v348, 4294901760
        %1615 = vmatprep.subr.mxu0 %v1614
        %v1616 = vand.u32 %v347, 4294901760
        %1617 = vmatpush2.msra.mxu0 %v1616
        %v1618 = vand.u32 %v346, 4294901760
        %1619 = vmatprep.subr.mxu0 %v1618
        %v1620 = vand.u32 %v345, 4294901760
        %1621 = vmatpush2.msra.mxu0 %v1620
        %v1622 = vand.u32 %v344, 4294901760
        %1623 = vmatprep.subr.mxu0 %v1622
        %v1624 = vand.u32 %v343, 4294901760
        %1625 = vmatpush2.msra.mxu0 %v1624
        %v1626 = vand.u32 %v342, 4294901760
        %1627 = vmatprep.subr.mxu0 %v1626
        %v1628 = vand.u32 %v341, 4294901760
        %1629 = vmatpush2.msra.mxu0 %v1628
        %v1630 = vand.u32 %v340, 4294901760
        %1631 = vmatprep.subr.mxu0 %v1630
        %v1632 = vand.u32 %v339, 4294901760
        %1633 = vmatpush2.msra.mxu0 %v1632
        %v1634 = vand.u32 %v338, 4294901760
        %1635 = vmatprep.subr.mxu0 %v1634
        %v1636 = vand.u32 %v337, 4294901760
        %1637 = vmatpush2.msra.mxu0 %v1636
        %v1638 = vand.u32 %v336, 4294901760
        %1639 = vmatprep.subr.mxu0 %v1638
        %v1640 = vand.u32 %v335, 4294901760
        %1641 = vmatpush2.msra.mxu0 %v1640
        %v1642 = vand.u32 %v237, 4294901760
        %1643 = vmatprep.mubr.f32.mxu0 %v1642
        %v1644 = vand.u32 %v236, 4294901760
        %1645 = vmatmul.mubr.f32.gmra.mxu0 %v1644
        %v1646 = vpop.f32.mrf.mxu0
        %v1647 = vadd.f32 %v1510, %v1646
        %v1648 = vpop.f32.mrf.mxu0
        %v1649 = vadd.f32 %v1512, %v1648
        %1650 = vdwg.mxu0
        %v1651 = vand.u32 %v269, 4294901760
        %1652 = vmatprep.subr.mxu0 %v1651
        %v1653 = vand.u32 %v268, 4294901760
        %1654 = vmatpush1.msra.mxu0 %v1653
        %v1655 = vand.u32 %v267, 4294901760
        %1656 = vmatprep.subr.mxu0 %v1655
        %v1657 = vand.u32 %v266, 4294901760
        %1658 = vmatpush1.msra.mxu0 %v1657
        %v1659 = vand.u32 %v265, 4294901760
        %1660 = vmatprep.subr.mxu0 %v1659
        %v1661 = vand.u32 %v264, 4294901760
        %1662 = vmatpush1.msra.mxu0 %v1661
        %v1663 = vand.u32 %v263, 4294901760
        %1664 = vmatprep.subr.mxu0 %v1663
        %v1665 = vand.u32 %v262, 4294901760
        %1666 = vmatpush1.msra.mxu0 %v1665
        %v1667 = vand.u32 %v261, 4294901760
        %1668 = vmatprep.subr.mxu0 %v1667
        %v1669 = vand.u32 %v260, 4294901760
        %1670 = vmatpush1.msra.mxu0 %v1669
        %v1671 = vand.u32 %v259, 4294901760
        %1672 = vmatprep.subr.mxu0 %v1671
        %v1673 = vand.u32 %v258, 4294901760
        %1674 = vmatpush1.msra.mxu0 %v1673
        %v1675 = vand.u32 %v257, 4294901760
        %1676 = vmatprep.subr.mxu0 %v1675
        %v1677 = vand.u32 %v256, 4294901760
        %1678 = vmatpush1.msra.mxu0 %v1677
        %v1679 = vand.u32 %v255, 4294901760
        %1680 = vmatprep.subr.mxu0 %v1679
        %v1681 = vand.u32 %v254, 4294901760
        %1682 = vmatpush1.msra.mxu0 %v1681
        %v1683 = vand.u32 %v253, 4294901760
        %1684 = vmatprep.subr.mxu0 %v1683
        %v1685 = vand.u32 %v252, 4294901760
        %1686 = vmatpush1.msra.mxu0 %v1685
        %v1687 = vand.u32 %v251, 4294901760
        %1688 = vmatprep.subr.mxu0 %v1687
        %v1689 = vand.u32 %v250, 4294901760
        %1690 = vmatpush1.msra.mxu0 %v1689
        %v1691 = vand.u32 %v249, 4294901760
        %1692 = vmatprep.subr.mxu0 %v1691
        %v1693 = vand.u32 %v248, 4294901760
        %1694 = vmatpush1.msra.mxu0 %v1693
        %v1695 = vand.u32 %v247, 4294901760
        %1696 = vmatprep.subr.mxu0 %v1695
        %v1697 = vand.u32 %v246, 4294901760
        %1698 = vmatpush1.msra.mxu0 %v1697
        %v1699 = vand.u32 %v245, 4294901760
        %1700 = vmatprep.subr.mxu0 %v1699
        %v1701 = vand.u32 %v244, 4294901760
        %1702 = vmatpush1.msra.mxu0 %v1701
        %v1703 = vand.u32 %v243, 4294901760
        %1704 = vmatprep.subr.mxu0 %v1703
        %v1705 = vand.u32 %v242, 4294901760
        %1706 = vmatpush1.msra.mxu0 %v1705
        %v1707 = vand.u32 %v241, 4294901760
        %1708 = vmatprep.subr.mxu0 %v1707
        %v1709 = vand.u32 %v240, 4294901760
        %1710 = vmatpush1.msra.mxu0 %v1709
        %v1711 = vand.u32 %v239, 4294901760
        %1712 = vmatprep.subr.mxu0 %v1711
        %v1713 = vand.u32 %v238, 4294901760
        %1714 = vmatpush1.msra.mxu0 %v1713
        %v1715 = vand.u32 %v301, 4294901760
        %1716 = vmatprep.subr.mxu0 %v1715
        %v1717 = vand.u32 %v300, 4294901760
        %1718 = vmatpush2.msra.mxu0 %v1717
        %v1719 = vand.u32 %v299, 4294901760
        %1720 = vmatprep.subr.mxu0 %v1719
        %v1721 = vand.u32 %v298, 4294901760
        %1722 = vmatpush2.msra.mxu0 %v1721
        %v1723 = vand.u32 %v297, 4294901760
        %1724 = vmatprep.subr.mxu0 %v1723
        %v1725 = vand.u32 %v296, 4294901760
        %1726 = vmatpush2.msra.mxu0 %v1725
        %v1727 = vand.u32 %v295, 4294901760
        %1728 = vmatprep.subr.mxu0 %v1727
        %v1729 = vand.u32 %v294, 4294901760
        %1730 = vmatpush2.msra.mxu0 %v1729
        %v1731 = vand.u32 %v293, 4294901760
        %1732 = vmatprep.subr.mxu0 %v1731
        %v1733 = vand.u32 %v292, 4294901760
        %1734 = vmatpush2.msra.mxu0 %v1733
        %v1735 = vand.u32 %v291, 4294901760
        %1736 = vmatprep.subr.mxu0 %v1735
        %v1737 = vand.u32 %v290, 4294901760
        %1738 = vmatpush2.msra.mxu0 %v1737
        %v1739 = vand.u32 %v289, 4294901760
        %1740 = vmatprep.subr.mxu0 %v1739
        %v1741 = vand.u32 %v288, 4294901760
        %1742 = vmatpush2.msra.mxu0 %v1741
        %v1743 = vand.u32 %v287, 4294901760
        %1744 = vmatprep.subr.mxu0 %v1743
        %v1745 = vand.u32 %v286, 4294901760
        %1746 = vmatpush2.msra.mxu0 %v1745
        %v1747 = vand.u32 %v285, 4294901760
        %1748 = vmatprep.subr.mxu0 %v1747
        %v1749 = vand.u32 %v284, 4294901760
        %1750 = vmatpush2.msra.mxu0 %v1749
        %v1751 = vand.u32 %v283, 4294901760
        %1752 = vmatprep.subr.mxu0 %v1751
        %v1753 = vand.u32 %v282, 4294901760
        %1754 = vmatpush2.msra.mxu0 %v1753
        %v1755 = vand.u32 %v281, 4294901760
        %1756 = vmatprep.subr.mxu0 %v1755
        %v1757 = vand.u32 %v280, 4294901760
        %1758 = vmatpush2.msra.mxu0 %v1757
        %v1759 = vand.u32 %v279, 4294901760
        %1760 = vmatprep.subr.mxu0 %v1759
        %v1761 = vand.u32 %v278, 4294901760
        %1762 = vmatpush2.msra.mxu0 %v1761
        %v1763 = vand.u32 %v277, 4294901760
        %1764 = vmatprep.subr.mxu0 %v1763
        %v1765 = vand.u32 %v276, 4294901760
        %1766 = vmatpush2.msra.mxu0 %v1765
        %v1767 = vand.u32 %v275, 4294901760
        %1768 = vmatprep.subr.mxu0 %v1767
        %v1769 = vand.u32 %v274, 4294901760
        %1770 = vmatpush2.msra.mxu0 %v1769
        %v1771 = vand.u32 %v273, 4294901760
        %1772 = vmatprep.subr.mxu0 %v1771
        %v1773 = vand.u32 %v272, 4294901760
        %1774 = vmatpush2.msra.mxu0 %v1773
        %v1775 = vand.u32 %v271, 4294901760
        %1776 = vmatprep.subr.mxu0 %v1775
        %v1777 = vand.u32 %v270, 4294901760
        %1778 = vmatpush2.msra.mxu0 %v1777
        %v1779 = vand.u32 %v221, 4294901760
        %v1780 = vsub.f32 %v221, %v1779
        %v1781 = vand.u32 %v1780, 4294901760
        %v1782 = vsub.f32 %v1780, %v1781
        %v1783 = vand.u32 %v1782, 4294901760
        %1784 = vmatprep.mubr.f32.mxu0 %v1783
        %v1785 = vand.u32 %v214, 4294901760
        %v1786 = vsub.f32 %v214, %v1785
        %v1787 = vand.u32 %v1786, 4294901760
        %v1788 = vsub.f32 %v1786, %v1787
        %v1789 = vand.u32 %v1788, 4294901760
        %1790 = vmatmul.mubr.f32.gmra.mxu0 %v1789
        %v1791 = vpop.f32.mrf.mxu0
        %v1792 = vadd.f32 %v1647, %v1791
        %v1793 = vpop.f32.mrf.mxu0
        %v1794 = vadd.f32 %v1649, %v1793
        %1795 = vdwg.mxu0
        %v1796 = vand.u32 %v269, 4294901760
        %v1797 = vsub.f32 %v269, %v1796
        %v1798 = vand.u32 %v1797, 4294901760
        %v1799 = vsub.f32 %v1797, %v1798
        %v1800 = vand.u32 %v1799, 4294901760
        %1801 = vmatprep.subr.mxu0 %v1800
        %v1802 = vand.u32 %v268, 4294901760
        %v1803 = vsub.f32 %v268, %v1802
        %v1804 = vand.u32 %v1803, 4294901760
        %v1805 = vsub.f32 %v1803, %v1804
        %v1806 = vand.u32 %v1805, 4294901760
        %1807 = vmatpush1.msra.mxu0 %v1806
        %v1808 = vand.u32 %v267, 4294901760
        %v1809 = vsub.f32 %v267, %v1808
        %v1810 = vand.u32 %v1809, 4294901760
        %v1811 = vsub.f32 %v1809, %v1810
        %v1812 = vand.u32 %v1811, 4294901760
        %1813 = vmatprep.subr.mxu0 %v1812
        %v1814 = vand.u32 %v266, 4294901760
        %v1815 = vsub.f32 %v266, %v1814
        %v1816 = vand.u32 %v1815, 4294901760
        %v1817 = vsub.f32 %v1815, %v1816
        %v1818 = vand.u32 %v1817, 4294901760
        %1819 = vmatpush1.msra.mxu0 %v1818
        %v1820 = vand.u32 %v265, 4294901760
        %v1821 = vsub.f32 %v265, %v1820
        %v1822 = vand.u32 %v1821, 4294901760
        %v1823 = vsub.f32 %v1821, %v1822
        %v1824 = vand.u32 %v1823, 4294901760
        %1825 = vmatprep.subr.mxu0 %v1824
        %v1826 = vand.u32 %v264, 4294901760
        %v1827 = vsub.f32 %v264, %v1826
        %v1828 = vand.u32 %v1827, 4294901760
        %v1829 = vsub.f32 %v1827, %v1828
        %v1830 = vand.u32 %v1829, 4294901760
        %1831 = vmatpush1.msra.mxu0 %v1830
        %v1832 = vand.u32 %v263, 4294901760
        %v1833 = vsub.f32 %v263, %v1832
        %v1834 = vand.u32 %v1833, 4294901760
        %v1835 = vsub.f32 %v1833, %v1834
        %v1836 = vand.u32 %v1835, 4294901760
        %1837 = vmatprep.subr.mxu0 %v1836
        %v1838 = vand.u32 %v262, 4294901760
        %v1839 = vsub.f32 %v262, %v1838
        %v1840 = vand.u32 %v1839, 4294901760
        %v1841 = vsub.f32 %v1839, %v1840
        %v1842 = vand.u32 %v1841, 4294901760
        %1843 = vmatpush1.msra.mxu0 %v1842
        %v1844 = vand.u32 %v261, 4294901760
        %v1845 = vsub.f32 %v261, %v1844
        %v1846 = vand.u32 %v1845, 4294901760
        %v1847 = vsub.f32 %v1845, %v1846
        %v1848 = vand.u32 %v1847, 4294901760
        %1849 = vmatprep.subr.mxu0 %v1848
        %v1850 = vand.u32 %v260, 4294901760
        %v1851 = vsub.f32 %v260, %v1850
        %v1852 = vand.u32 %v1851, 4294901760
        %v1853 = vsub.f32 %v1851, %v1852
        %v1854 = vand.u32 %v1853, 4294901760
        %1855 = vmatpush1.msra.mxu0 %v1854
        %v1856 = vand.u32 %v259, 4294901760
        %v1857 = vsub.f32 %v259, %v1856
        %v1858 = vand.u32 %v1857, 4294901760
        %v1859 = vsub.f32 %v1857, %v1858
        %v1860 = vand.u32 %v1859, 4294901760
        %1861 = vmatprep.subr.mxu0 %v1860
        %v1862 = vand.u32 %v258, 4294901760
        %v1863 = vsub.f32 %v258, %v1862
        %v1864 = vand.u32 %v1863, 4294901760
        %v1865 = vsub.f32 %v1863, %v1864
        %v1866 = vand.u32 %v1865, 4294901760
        %1867 = vmatpush1.msra.mxu0 %v1866
        %v1868 = vand.u32 %v257, 4294901760
        %v1869 = vsub.f32 %v257, %v1868
        %v1870 = vand.u32 %v1869, 4294901760
        %v1871 = vsub.f32 %v1869, %v1870
        %v1872 = vand.u32 %v1871, 4294901760
        %1873 = vmatprep.subr.mxu0 %v1872
        %v1874 = vand.u32 %v256, 4294901760
        %v1875 = vsub.f32 %v256, %v1874
        %v1876 = vand.u32 %v1875, 4294901760
        %v1877 = vsub.f32 %v1875, %v1876
        %v1878 = vand.u32 %v1877, 4294901760
        %1879 = vmatpush1.msra.mxu0 %v1878
        %v1880 = vand.u32 %v255, 4294901760
        %v1881 = vsub.f32 %v255, %v1880
        %v1882 = vand.u32 %v1881, 4294901760
        %v1883 = vsub.f32 %v1881, %v1882
        %v1884 = vand.u32 %v1883, 4294901760
        %1885 = vmatprep.subr.mxu0 %v1884
        %v1886 = vand.u32 %v254, 4294901760
        %v1887 = vsub.f32 %v254, %v1886
        %v1888 = vand.u32 %v1887, 4294901760
        %v1889 = vsub.f32 %v1887, %v1888
        %v1890 = vand.u32 %v1889, 4294901760
        %1891 = vmatpush1.msra.mxu0 %v1890
        %v1892 = vand.u32 %v253, 4294901760
        %v1893 = vsub.f32 %v253, %v1892
        %v1894 = vand.u32 %v1893, 4294901760
        %v1895 = vsub.f32 %v1893, %v1894
        %v1896 = vand.u32 %v1895, 4294901760
        %1897 = vmatprep.subr.mxu0 %v1896
        %v1898 = vand.u32 %v252, 4294901760
        %v1899 = vsub.f32 %v252, %v1898
        %v1900 = vand.u32 %v1899, 4294901760
        %v1901 = vsub.f32 %v1899, %v1900
        %v1902 = vand.u32 %v1901, 4294901760
        %1903 = vmatpush1.msra.mxu0 %v1902
        %v1904 = vand.u32 %v251, 4294901760
        %v1905 = vsub.f32 %v251, %v1904
        %v1906 = vand.u32 %v1905, 4294901760
        %v1907 = vsub.f32 %v1905, %v1906
        %v1908 = vand.u32 %v1907, 4294901760
        %1909 = vmatprep.subr.mxu0 %v1908
        %v1910 = vand.u32 %v250, 4294901760
        %v1911 = vsub.f32 %v250, %v1910
        %v1912 = vand.u32 %v1911, 4294901760
        %v1913 = vsub.f32 %v1911, %v1912
        %v1914 = vand.u32 %v1913, 4294901760
        %1915 = vmatpush1.msra.mxu0 %v1914
        %v1916 = vand.u32 %v249, 4294901760
        %v1917 = vsub.f32 %v249, %v1916
        %v1918 = vand.u32 %v1917, 4294901760
        %v1919 = vsub.f32 %v1917, %v1918
        %v1920 = vand.u32 %v1919, 4294901760
        %1921 = vmatprep.subr.mxu0 %v1920
        %v1922 = vand.u32 %v248, 4294901760
        %v1923 = vsub.f32 %v248, %v1922
        %v1924 = vand.u32 %v1923, 4294901760
        %v1925 = vsub.f32 %v1923, %v1924
        %v1926 = vand.u32 %v1925, 4294901760
        %1927 = vmatpush1.msra.mxu0 %v1926
        %v1928 = vand.u32 %v247, 4294901760
        %v1929 = vsub.f32 %v247, %v1928
        %v1930 = vand.u32 %v1929, 4294901760
        %v1931 = vsub.f32 %v1929, %v1930
        %v1932 = vand.u32 %v1931, 4294901760
        %1933 = vmatprep.subr.mxu0 %v1932
        %v1934 = vand.u32 %v246, 4294901760
        %v1935 = vsub.f32 %v246, %v1934
        %v1936 = vand.u32 %v1935, 4294901760
        %v1937 = vsub.f32 %v1935, %v1936
        %v1938 = vand.u32 %v1937, 4294901760
        %1939 = vmatpush1.msra.mxu0 %v1938
        %v1940 = vand.u32 %v245, 4294901760
        %v1941 = vsub.f32 %v245, %v1940
        %v1942 = vand.u32 %v1941, 4294901760
        %v1943 = vsub.f32 %v1941, %v1942
        %v1944 = vand.u32 %v1943, 4294901760
        %1945 = vmatprep.subr.mxu0 %v1944
        %v1946 = vand.u32 %v244, 4294901760
        %v1947 = vsub.f32 %v244, %v1946
        %v1948 = vand.u32 %v1947, 4294901760
        %v1949 = vsub.f32 %v1947, %v1948
        %v1950 = vand.u32 %v1949, 4294901760
        %1951 = vmatpush1.msra.mxu0 %v1950
        %v1952 = vand.u32 %v243, 4294901760
        %v1953 = vsub.f32 %v243, %v1952
        %v1954 = vand.u32 %v1953, 4294901760
        %v1955 = vsub.f32 %v1953, %v1954
        %v1956 = vand.u32 %v1955, 4294901760
        %1957 = vmatprep.subr.mxu0 %v1956
        %v1958 = vand.u32 %v242, 4294901760
        %v1959 = vsub.f32 %v242, %v1958
        %v1960 = vand.u32 %v1959, 4294901760
        %v1961 = vsub.f32 %v1959, %v1960
        %v1962 = vand.u32 %v1961, 4294901760
        %1963 = vmatpush1.msra.mxu0 %v1962
        %v1964 = vand.u32 %v241, 4294901760
        %v1965 = vsub.f32 %v241, %v1964
        %v1966 = vand.u32 %v1965, 4294901760
        %v1967 = vsub.f32 %v1965, %v1966
        %v1968 = vand.u32 %v1967, 4294901760
        %1969 = vmatprep.subr.mxu0 %v1968
        %v1970 = vand.u32 %v240, 4294901760
        %v1971 = vsub.f32 %v240, %v1970
        %v1972 = vand.u32 %v1971, 4294901760
        %v1973 = vsub.f32 %v1971, %v1972
        %v1974 = vand.u32 %v1973, 4294901760
        %1975 = vmatpush1.msra.mxu0 %v1974
        %v1976 = vand.u32 %v239, 4294901760
        %v1977 = vsub.f32 %v239, %v1976
        %v1978 = vand.u32 %v1977, 4294901760
        %v1979 = vsub.f32 %v1977, %v1978
        %v1980 = vand.u32 %v1979, 4294901760
        %1981 = vmatprep.subr.mxu0 %v1980
        %v1982 = vand.u32 %v238, 4294901760
        %v1983 = vsub.f32 %v238, %v1982
        %v1984 = vand.u32 %v1983, 4294901760
        %v1985 = vsub.f32 %v1983, %v1984
        %v1986 = vand.u32 %v1985, 4294901760
        %1987 = vmatpush1.msra.mxu0 %v1986
        %v1988 = vand.u32 %v301, 4294901760
        %v1989 = vsub.f32 %v301, %v1988
        %v1990 = vand.u32 %v1989, 4294901760
        %v1991 = vsub.f32 %v1989, %v1990
        %v1992 = vand.u32 %v1991, 4294901760
        %1993 = vmatprep.subr.mxu0 %v1992
        %v1994 = vand.u32 %v300, 4294901760
        %v1995 = vsub.f32 %v300, %v1994
        %v1996 = vand.u32 %v1995, 4294901760
        %v1997 = vsub.f32 %v1995, %v1996
        %v1998 = vand.u32 %v1997, 4294901760
        %1999 = vmatpush2.msra.mxu0 %v1998
        %v2000 = vand.u32 %v299, 4294901760
        %v2001 = vsub.f32 %v299, %v2000
        %v2002 = vand.u32 %v2001, 4294901760
        %v2003 = vsub.f32 %v2001, %v2002
        %v2004 = vand.u32 %v2003, 4294901760
        %2005 = vmatprep.subr.mxu0 %v2004
        %v2006 = vand.u32 %v298, 4294901760
        %v2007 = vsub.f32 %v298, %v2006
        %v2008 = vand.u32 %v2007, 4294901760
        %v2009 = vsub.f32 %v2007, %v2008
        %v2010 = vand.u32 %v2009, 4294901760
        %2011 = vmatpush2.msra.mxu0 %v2010
        %v2012 = vand.u32 %v297, 4294901760
        %v2013 = vsub.f32 %v297, %v2012
        %v2014 = vand.u32 %v2013, 4294901760
        %v2015 = vsub.f32 %v2013, %v2014
        %v2016 = vand.u32 %v2015, 4294901760
        %2017 = vmatprep.subr.mxu0 %v2016
        %v2018 = vand.u32 %v296, 4294901760
        %v2019 = vsub.f32 %v296, %v2018
        %v2020 = vand.u32 %v2019, 4294901760
        %v2021 = vsub.f32 %v2019, %v2020
        %v2022 = vand.u32 %v2021, 4294901760
        %2023 = vmatpush2.msra.mxu0 %v2022
        %v2024 = vand.u32 %v295, 4294901760
        %v2025 = vsub.f32 %v295, %v2024
        %v2026 = vand.u32 %v2025, 4294901760
        %v2027 = vsub.f32 %v2025, %v2026
        %v2028 = vand.u32 %v2027, 4294901760
        %2029 = vmatprep.subr.mxu0 %v2028
        %v2030 = vand.u32 %v294, 4294901760
        %v2031 = vsub.f32 %v294, %v2030
        %v2032 = vand.u32 %v2031, 4294901760
        %v2033 = vsub.f32 %v2031, %v2032
        %v2034 = vand.u32 %v2033, 4294901760
        %2035 = vmatpush2.msra.mxu0 %v2034
        %v2036 = vand.u32 %v293, 4294901760
        %v2037 = vsub.f32 %v293, %v2036
        %v2038 = vand.u32 %v2037, 4294901760
        %v2039 = vsub.f32 %v2037, %v2038
        %v2040 = vand.u32 %v2039, 4294901760
        %2041 = vmatprep.subr.mxu0 %v2040
        %v2042 = vand.u32 %v292, 4294901760
        %v2043 = vsub.f32 %v292, %v2042
        %v2044 = vand.u32 %v2043, 4294901760
        %v2045 = vsub.f32 %v2043, %v2044
        %v2046 = vand.u32 %v2045, 4294901760
        %2047 = vmatpush2.msra.mxu0 %v2046
        %v2048 = vand.u32 %v291, 4294901760
        %v2049 = vsub.f32 %v291, %v2048
        %v2050 = vand.u32 %v2049, 4294901760
        %v2051 = vsub.f32 %v2049, %v2050
        %v2052 = vand.u32 %v2051, 4294901760
        %2053 = vmatprep.subr.mxu0 %v2052
        %v2054 = vand.u32 %v290, 4294901760
        %v2055 = vsub.f32 %v290, %v2054
        %v2056 = vand.u32 %v2055, 4294901760
        %v2057 = vsub.f32 %v2055, %v2056
        %v2058 = vand.u32 %v2057, 4294901760
        %2059 = vmatpush2.msra.mxu0 %v2058
        %v2060 = vand.u32 %v289, 4294901760
        %v2061 = vsub.f32 %v289, %v2060
        %v2062 = vand.u32 %v2061, 4294901760
        %v2063 = vsub.f32 %v2061, %v2062
        %v2064 = vand.u32 %v2063, 4294901760
        %2065 = vmatprep.subr.mxu0 %v2064
        %v2066 = vand.u32 %v288, 4294901760
        %v2067 = vsub.f32 %v288, %v2066
        %v2068 = vand.u32 %v2067, 4294901760
        %v2069 = vsub.f32 %v2067, %v2068
        %v2070 = vand.u32 %v2069, 4294901760
        %2071 = vmatpush2.msra.mxu0 %v2070
        %v2072 = vand.u32 %v287, 4294901760
        %v2073 = vsub.f32 %v287, %v2072
        %v2074 = vand.u32 %v2073, 4294901760
        %v2075 = vsub.f32 %v2073, %v2074
        %v2076 = vand.u32 %v2075, 4294901760
        %2077 = vmatprep.subr.mxu0 %v2076
        %v2078 = vand.u32 %v286, 4294901760
        %v2079 = vsub.f32 %v286, %v2078
        %v2080 = vand.u32 %v2079, 4294901760
        %v2081 = vsub.f32 %v2079, %v2080
        %v2082 = vand.u32 %v2081, 4294901760
        %2083 = vmatpush2.msra.mxu0 %v2082
        %v2084 = vand.u32 %v285, 4294901760
        %v2085 = vsub.f32 %v285, %v2084
        %v2086 = vand.u32 %v2085, 4294901760
        %v2087 = vsub.f32 %v2085, %v2086
        %v2088 = vand.u32 %v2087, 4294901760
        %2089 = vmatprep.subr.mxu0 %v2088
        %v2090 = vand.u32 %v284, 4294901760
        %v2091 = vsub.f32 %v284, %v2090
        %v2092 = vand.u32 %v2091, 4294901760
        %v2093 = vsub.f32 %v2091, %v2092
        %v2094 = vand.u32 %v2093, 4294901760
        %2095 = vmatpush2.msra.mxu0 %v2094
        %v2096 = vand.u32 %v283, 4294901760
        %v2097 = vsub.f32 %v283, %v2096
        %v2098 = vand.u32 %v2097, 4294901760
        %v2099 = vsub.f32 %v2097, %v2098
        %v2100 = vand.u32 %v2099, 4294901760
        %2101 = vmatprep.subr.mxu0 %v2100
        %v2102 = vand.u32 %v282, 4294901760
        %v2103 = vsub.f32 %v282, %v2102
        %v2104 = vand.u32 %v2103, 4294901760
        %v2105 = vsub.f32 %v2103, %v2104
        %v2106 = vand.u32 %v2105, 4294901760
        %2107 = vmatpush2.msra.mxu0 %v2106
        %v2108 = vand.u32 %v281, 4294901760
        %v2109 = vsub.f32 %v281, %v2108
        %v2110 = vand.u32 %v2109, 4294901760
        %v2111 = vsub.f32 %v2109, %v2110
        %v2112 = vand.u32 %v2111, 4294901760
        %2113 = vmatprep.subr.mxu0 %v2112
        %v2114 = vand.u32 %v280, 4294901760
        %v2115 = vsub.f32 %v280, %v2114
        %v2116 = vand.u32 %v2115, 4294901760
        %v2117 = vsub.f32 %v2115, %v2116
        %v2118 = vand.u32 %v2117, 4294901760
        %2119 = vmatpush2.msra.mxu0 %v2118
        %v2120 = vand.u32 %v279, 4294901760
        %v2121 = vsub.f32 %v279, %v2120
        %v2122 = vand.u32 %v2121, 4294901760
        %v2123 = vsub.f32 %v2121, %v2122
        %v2124 = vand.u32 %v2123, 4294901760
        %2125 = vmatprep.subr.mxu0 %v2124
        %v2126 = vand.u32 %v278, 4294901760
        %v2127 = vsub.f32 %v278, %v2126
        %v2128 = vand.u32 %v2127, 4294901760
        %v2129 = vsub.f32 %v2127, %v2128
        %v2130 = vand.u32 %v2129, 4294901760
        %2131 = vmatpush2.msra.mxu0 %v2130
        %v2132 = vand.u32 %v277, 4294901760
        %v2133 = vsub.f32 %v277, %v2132
        %v2134 = vand.u32 %v2133, 4294901760
        %v2135 = vsub.f32 %v2133, %v2134
        %v2136 = vand.u32 %v2135, 4294901760
        %2137 = vmatprep.subr.mxu0 %v2136
        %v2138 = vand.u32 %v276, 4294901760
        %v2139 = vsub.f32 %v276, %v2138
        %v2140 = vand.u32 %v2139, 4294901760
        %v2141 = vsub.f32 %v2139, %v2140
        %v2142 = vand.u32 %v2141, 4294901760
        %2143 = vmatpush2.msra.mxu0 %v2142
        %v2144 = vand.u32 %v275, 4294901760
        %v2145 = vsub.f32 %v275, %v2144
        %v2146 = vand.u32 %v2145, 4294901760
        %v2147 = vsub.f32 %v2145, %v2146
        %v2148 = vand.u32 %v2147, 4294901760
        %2149 = vmatprep.subr.mxu0 %v2148
        %v2150 = vand.u32 %v274, 4294901760
        %v2151 = vsub.f32 %v274, %v2150
        %v2152 = vand.u32 %v2151, 4294901760
        %v2153 = vsub.f32 %v2151, %v2152
        %v2154 = vand.u32 %v2153, 4294901760
        %2155 = vmatpush2.msra.mxu0 %v2154
        %v2156 = vand.u32 %v273, 4294901760
        %v2157 = vsub.f32 %v273, %v2156
        %v2158 = vand.u32 %v2157, 4294901760
        %v2159 = vsub.f32 %v2157, %v2158
        %v2160 = vand.u32 %v2159, 4294901760
        %2161 = vmatprep.subr.mxu0 %v2160
        %v2162 = vand.u32 %v272, 4294901760
        %v2163 = vsub.f32 %v272, %v2162
        %v2164 = vand.u32 %v2163, 4294901760
        %v2165 = vsub.f32 %v2163, %v2164
        %v2166 = vand.u32 %v2165, 4294901760
        %2167 = vmatpush2.msra.mxu0 %v2166
        %v2168 = vand.u32 %v271, 4294901760
        %v2169 = vsub.f32 %v271, %v2168
        %v2170 = vand.u32 %v2169, 4294901760
        %v2171 = vsub.f32 %v2169, %v2170
        %v2172 = vand.u32 %v2171, 4294901760
        %2173 = vmatprep.subr.mxu0 %v2172
        %v2174 = vand.u32 %v270, 4294901760
        %v2175 = vsub.f32 %v270, %v2174
        %v2176 = vand.u32 %v2175, 4294901760
        %v2177 = vsub.f32 %v2175, %v2176
        %v2178 = vand.u32 %v2177, 4294901760
        %2179 = vmatpush2.msra.mxu0 %v2178
        %v2180 = vand.u32 %v221, 4294901760
        %2181 = vmatprep.mubr.f32.mxu0 %v2180
        %v2182 = vand.u32 %v214, 4294901760
        %2183 = vmatmul.mubr.f32.gmra.mxu0 %v2182
        %v2184 = vpop.f32.mrf.mxu0
        %v2185 = vadd.f32 %v1792, %v2184
        %v2186 = vpop.f32.mrf.mxu0
        %v2187 = vadd.f32 %v1794, %v2186
        %2188 = vdwg.mxu0
        %v2189 = vand.u32 %v269, 4294901760
        %v2190 = vsub.f32 %v269, %v2189
        %2191 = vmatprep.subr.mxu0 %v2190
        %v2192 = vand.u32 %v268, 4294901760
        %v2193 = vsub.f32 %v268, %v2192
        %2194 = vmatpush1.msra.mxu0 %v2193
        %v2195 = vand.u32 %v267, 4294901760
        %v2196 = vsub.f32 %v267, %v2195
        %2197 = vmatprep.subr.mxu0 %v2196
        %v2198 = vand.u32 %v266, 4294901760
        %v2199 = vsub.f32 %v266, %v2198
        %2200 = vmatpush1.msra.mxu0 %v2199
        %v2201 = vand.u32 %v265, 4294901760
        %v2202 = vsub.f32 %v265, %v2201
        %2203 = vmatprep.subr.mxu0 %v2202
        %v2204 = vand.u32 %v264, 4294901760
        %v2205 = vsub.f32 %v264, %v2204
        %2206 = vmatpush1.msra.mxu0 %v2205
        %v2207 = vand.u32 %v263, 4294901760
        %v2208 = vsub.f32 %v263, %v2207
        %2209 = vmatprep.subr.mxu0 %v2208
        %v2210 = vand.u32 %v262, 4294901760
        %v2211 = vsub.f32 %v262, %v2210
        %2212 = vmatpush1.msra.mxu0 %v2211
        %v2213 = vand.u32 %v261, 4294901760
        %v2214 = vsub.f32 %v261, %v2213
        %2215 = vmatprep.subr.mxu0 %v2214
        %v2216 = vand.u32 %v260, 4294901760
        %v2217 = vsub.f32 %v260, %v2216
        %2218 = vmatpush1.msra.mxu0 %v2217
        %v2219 = vand.u32 %v259, 4294901760
        %v2220 = vsub.f32 %v259, %v2219
        %2221 = vmatprep.subr.mxu0 %v2220
        %v2222 = vand.u32 %v258, 4294901760
        %v2223 = vsub.f32 %v258, %v2222
        %2224 = vmatpush1.msra.mxu0 %v2223
        %v2225 = vand.u32 %v257, 4294901760
        %v2226 = vsub.f32 %v257, %v2225
        %2227 = vmatprep.subr.mxu0 %v2226
        %v2228 = vand.u32 %v256, 4294901760
        %v2229 = vsub.f32 %v256, %v2228
        %2230 = vmatpush1.msra.mxu0 %v2229
        %v2231 = vand.u32 %v255, 4294901760
        %v2232 = vsub.f32 %v255, %v2231
        %2233 = vmatprep.subr.mxu0 %v2232
        %v2234 = vand.u32 %v254, 4294901760
        %v2235 = vsub.f32 %v254, %v2234
        %2236 = vmatpush1.msra.mxu0 %v2235
        %v2237 = vand.u32 %v253, 4294901760
        %v2238 = vsub.f32 %v253, %v2237
        %2239 = vmatprep.subr.mxu0 %v2238
        %v2240 = vand.u32 %v252, 4294901760
        %v2241 = vsub.f32 %v252, %v2240
        %2242 = vmatpush1.msra.mxu0 %v2241
        %v2243 = vand.u32 %v251, 4294901760
        %v2244 = vsub.f32 %v251, %v2243
        %2245 = vmatprep.subr.mxu0 %v2244
        %v2246 = vand.u32 %v250, 4294901760
        %v2247 = vsub.f32 %v250, %v2246
        %2248 = vmatpush1.msra.mxu0 %v2247
        %v2249 = vand.u32 %v249, 4294901760
        %v2250 = vsub.f32 %v249, %v2249
        %2251 = vmatprep.subr.mxu0 %v2250
        %v2252 = vand.u32 %v248, 4294901760
        %v2253 = vsub.f32 %v248, %v2252
        %2254 = vmatpush1.msra.mxu0 %v2253
        %v2255 = vand.u32 %v247, 4294901760
        %v2256 = vsub.f32 %v247, %v2255
        %2257 = vmatprep.subr.mxu0 %v2256
        %v2258 = vand.u32 %v246, 4294901760
        %v2259 = vsub.f32 %v246, %v2258
        %2260 = vmatpush1.msra.mxu0 %v2259
        %v2261 = vand.u32 %v245, 4294901760
        %v2262 = vsub.f32 %v245, %v2261
        %2263 = vmatprep.subr.mxu0 %v2262
        %v2264 = vand.u32 %v244, 4294901760
        %v2265 = vsub.f32 %v244, %v2264
        %2266 = vmatpush1.msra.mxu0 %v2265
        %v2267 = vand.u32 %v243, 4294901760
        %v2268 = vsub.f32 %v243, %v2267
        %2269 = vmatprep.subr.mxu0 %v2268
        %v2270 = vand.u32 %v242, 4294901760
        %v2271 = vsub.f32 %v242, %v2270
        %2272 = vmatpush1.msra.mxu0 %v2271
        %v2273 = vand.u32 %v241, 4294901760
        %v2274 = vsub.f32 %v241, %v2273
        %2275 = vmatprep.subr.mxu0 %v2274
        %v2276 = vand.u32 %v240, 4294901760
        %v2277 = vsub.f32 %v240, %v2276
        %2278 = vmatpush1.msra.mxu0 %v2277
        %v2279 = vand.u32 %v239, 4294901760
        %v2280 = vsub.f32 %v239, %v2279
        %2281 = vmatprep.subr.mxu0 %v2280
        %v2282 = vand.u32 %v238, 4294901760
        %v2283 = vsub.f32 %v238, %v2282
        %2284 = vmatpush1.msra.mxu0 %v2283
        %v2285 = vand.u32 %v301, 4294901760
        %v2286 = vsub.f32 %v301, %v2285
        %2287 = vmatprep.subr.mxu0 %v2286
        %v2288 = vand.u32 %v300, 4294901760
        %v2289 = vsub.f32 %v300, %v2288
        %2290 = vmatpush2.msra.mxu0 %v2289
        %v2291 = vand.u32 %v299, 4294901760
        %v2292 = vsub.f32 %v299, %v2291
        %2293 = vmatprep.subr.mxu0 %v2292
        %v2294 = vand.u32 %v298, 4294901760
        %v2295 = vsub.f32 %v298, %v2294
        %2296 = vmatpush2.msra.mxu0 %v2295
        %v2297 = vand.u32 %v297, 4294901760
        %v2298 = vsub.f32 %v297, %v2297
        %2299 = vmatprep.subr.mxu0 %v2298
        %v2300 = vand.u32 %v296, 4294901760
        %v2301 = vsub.f32 %v296, %v2300
        %2302 = vmatpush2.msra.mxu0 %v2301
        %v2303 = vand.u32 %v295, 4294901760
        %v2304 = vsub.f32 %v295, %v2303
        %2305 = vmatprep.subr.mxu0 %v2304
        %v2306 = vand.u32 %v294, 4294901760
        %v2307 = vsub.f32 %v294, %v2306
        %2308 = vmatpush2.msra.mxu0 %v2307
        %v2309 = vand.u32 %v293, 4294901760
        %v2310 = vsub.f32 %v293, %v2309
        %2311 = vmatprep.subr.mxu0 %v2310
        %v2312 = vand.u32 %v292, 4294901760
        %v2313 = vsub.f32 %v292, %v2312
        %2314 = vmatpush2.msra.mxu0 %v2313
        %v2315 = vand.u32 %v291, 4294901760
        %v2316 = vsub.f32 %v291, %v2315
        %2317 = vmatprep.subr.mxu0 %v2316
        %v2318 = vand.u32 %v290, 4294901760
        %v2319 = vsub.f32 %v290, %v2318
        %2320 = vmatpush2.msra.mxu0 %v2319
        %v2321 = vand.u32 %v289, 4294901760
        %v2322 = vsub.f32 %v289, %v2321
        %2323 = vmatprep.subr.mxu0 %v2322
        %v2324 = vand.u32 %v288, 4294901760
        %v2325 = vsub.f32 %v288, %v2324
        %2326 = vmatpush2.msra.mxu0 %v2325
        %v2327 = vand.u32 %v287, 4294901760
        %v2328 = vsub.f32 %v287, %v2327
        %2329 = vmatprep.subr.mxu0 %v2328
        %v2330 = vand.u32 %v286, 4294901760
        %v2331 = vsub.f32 %v286, %v2330
        %2332 = vmatpush2.msra.mxu0 %v2331
        %v2333 = vand.u32 %v285, 4294901760
        %v2334 = vsub.f32 %v285, %v2333
        %2335 = vmatprep.subr.mxu0 %v2334
        %v2336 = vand.u32 %v284, 4294901760
        %v2337 = vsub.f32 %v284, %v2336
        %2338 = vmatpush2.msra.mxu0 %v2337
        %v2339 = vand.u32 %v283, 4294901760
        %v2340 = vsub.f32 %v283, %v2339
        %2341 = vmatprep.subr.mxu0 %v2340
        %v2342 = vand.u32 %v282, 4294901760
        %v2343 = vsub.f32 %v282, %v2342
        %2344 = vmatpush2.msra.mxu0 %v2343
        %v2345 = vand.u32 %v281, 4294901760
        %v2346 = vsub.f32 %v281, %v2345
        %2347 = vmatprep.subr.mxu0 %v2346
        %v2348 = vand.u32 %v280, 4294901760
        %v2349 = vsub.f32 %v280, %v2348
        %2350 = vmatpush2.msra.mxu0 %v2349
        %v2351 = vand.u32 %v279, 4294901760
        %v2352 = vsub.f32 %v279, %v2351
        %2353 = vmatprep.subr.mxu0 %v2352
        %v2354 = vand.u32 %v278, 4294901760
        %v2355 = vsub.f32 %v278, %v2354
        %2356 = vmatpush2.msra.mxu0 %v2355
        %v2357 = vand.u32 %v277, 4294901760
        %v2358 = vsub.f32 %v277, %v2357
        %2359 = vmatprep.subr.mxu0 %v2358
        %v2360 = vand.u32 %v276, 4294901760
        %v2361 = vsub.f32 %v276, %v2360
        %2362 = vmatpush2.msra.mxu0 %v2361
        %v2363 = vand.u32 %v275, 4294901760
        %v2364 = vsub.f32 %v275, %v2363
        %2365 = vmatprep.subr.mxu0 %v2364
        %v2366 = vand.u32 %v274, 4294901760
        %v2367 = vsub.f32 %v274, %v2366
        %2368 = vmatpush2.msra.mxu0 %v2367
        %v2369 = vand.u32 %v273, 4294901760
        %v2370 = vsub.f32 %v273, %v2369
        %2371 = vmatprep.subr.mxu0 %v2370
        %v2372 = vand.u32 %v272, 4294901760
        %v2373 = vsub.f32 %v272, %v2372
        %2374 = vmatpush2.msra.mxu0 %v2373
        %v2375 = vand.u32 %v271, 4294901760
        %v2376 = vsub.f32 %v271, %v2375
        %2377 = vmatprep.subr.mxu0 %v2376
        %v2378 = vand.u32 %v270, 4294901760
        %v2379 = vsub.f32 %v270, %v2378
        %2380 = vmatpush2.msra.mxu0 %v2379
        %v2381 = vand.u32 %v221, 4294901760
        %v2382 = vsub.f32 %v221, %v2381
        %2383 = vmatprep.mubr.f32.mxu0 %v2382
        %v2384 = vand.u32 %v214, 4294901760
        %v2385 = vsub.f32 %v214, %v2384
        %2386 = vmatmul.mubr.f32.gmra.mxu0 %v2385
        %v2387 = vpop.f32.mrf.mxu0
        %v2388 = vadd.f32 %v2185, %v2387
        %v2389 = vpop.f32.mrf.mxu0
        %v2390 = vadd.f32 %v2187, %v2389
        %2391 = vdwg.mxu0
        %v2392 = vand.u32 %v269, 4294901760
        %2393 = vmatprep.subr.mxu0 %v2392
        %v2394 = vand.u32 %v268, 4294901760
        %2395 = vmatpush1.msra.mxu0 %v2394
        %v2396 = vand.u32 %v267, 4294901760
        %2397 = vmatprep.subr.mxu0 %v2396
        %v2398 = vand.u32 %v266, 4294901760
        %2399 = vmatpush1.msra.mxu0 %v2398
        %v2400 = vand.u32 %v265, 4294901760
        %2401 = vmatprep.subr.mxu0 %v2400
        %v2402 = vand.u32 %v264, 4294901760
        %2403 = vmatpush1.msra.mxu0 %v2402
        %v2404 = vand.u32 %v263, 4294901760
        %2405 = vmatprep.subr.mxu0 %v2404
        %v2406 = vand.u32 %v262, 4294901760
        %2407 = vmatpush1.msra.mxu0 %v2406
        %v2408 = vand.u32 %v261, 4294901760
        %2409 = vmatprep.subr.mxu0 %v2408
        %v2410 = vand.u32 %v260, 4294901760
        %2411 = vmatpush1.msra.mxu0 %v2410
        %v2412 = vand.u32 %v259, 4294901760
        %2413 = vmatprep.subr.mxu0 %v2412
        %v2414 = vand.u32 %v258, 4294901760
        %2415 = vmatpush1.msra.mxu0 %v2414
        %v2416 = vand.u32 %v257, 4294901760
        %2417 = vmatprep.subr.mxu0 %v2416
        %v2418 = vand.u32 %v256, 4294901760
        %2419 = vmatpush1.msra.mxu0 %v2418
        %v2420 = vand.u32 %v255, 4294901760
        %2421 = vmatprep.subr.mxu0 %v2420
        %v2422 = vand.u32 %v254, 4294901760
        %2423 = vmatpush1.msra.mxu0 %v2422
        %v2424 = vand.u32 %v253, 4294901760
        %2425 = vmatprep.subr.mxu0 %v2424
        %v2426 = vand.u32 %v252, 4294901760
        %2427 = vmatpush1.msra.mxu0 %v2426
        %v2428 = vand.u32 %v251, 4294901760
        %2429 = vmatprep.subr.mxu0 %v2428
        %v2430 = vand.u32 %v250, 4294901760
        %2431 = vmatpush1.msra.mxu0 %v2430
        %v2432 = vand.u32 %v249, 4294901760
        %2433 = vmatprep.subr.mxu0 %v2432
        %v2434 = vand.u32 %v248, 4294901760
        %2435 = vmatpush1.msra.mxu0 %v2434
        %v2436 = vand.u32 %v247, 4294901760
        %2437 = vmatprep.subr.mxu0 %v2436
        %v2438 = vand.u32 %v246, 4294901760
        %2439 = vmatpush1.msra.mxu0 %v2438
        %v2440 = vand.u32 %v245, 4294901760
        %2441 = vmatprep.subr.mxu0 %v2440
        %v2442 = vand.u32 %v244, 4294901760
        %2443 = vmatpush1.msra.mxu0 %v2442
        %v2444 = vand.u32 %v243, 4294901760
        %2445 = vmatprep.subr.mxu0 %v2444
        %v2446 = vand.u32 %v242, 4294901760
        %2447 = vmatpush1.msra.mxu0 %v2446
        %v2448 = vand.u32 %v241, 4294901760
        %2449 = vmatprep.subr.mxu0 %v2448
        %v2450 = vand.u32 %v240, 4294901760
        %2451 = vmatpush1.msra.mxu0 %v2450
        %v2452 = vand.u32 %v239, 4294901760
        %2453 = vmatprep.subr.mxu0 %v2452
        %v2454 = vand.u32 %v238, 4294901760
        %2455 = vmatpush1.msra.mxu0 %v2454
        %v2456 = vand.u32 %v301, 4294901760
        %2457 = vmatprep.subr.mxu0 %v2456
        %v2458 = vand.u32 %v300, 4294901760
        %2459 = vmatpush2.msra.mxu0 %v2458
        %v2460 = vand.u32 %v299, 4294901760
        %2461 = vmatprep.subr.mxu0 %v2460
        %v2462 = vand.u32 %v298, 4294901760
        %2463 = vmatpush2.msra.mxu0 %v2462
        %v2464 = vand.u32 %v297, 4294901760
        %2465 = vmatprep.subr.mxu0 %v2464
        %v2466 = vand.u32 %v296, 4294901760
        %2467 = vmatpush2.msra.mxu0 %v2466
        %v2468 = vand.u32 %v295, 4294901760
        %2469 = vmatprep.subr.mxu0 %v2468
        %v2470 = vand.u32 %v294, 4294901760
        %2471 = vmatpush2.msra.mxu0 %v2470
        %v2472 = vand.u32 %v293, 4294901760
        %2473 = vmatprep.subr.mxu0 %v2472
        %v2474 = vand.u32 %v292, 4294901760
        %2475 = vmatpush2.msra.mxu0 %v2474
        %v2476 = vand.u32 %v291, 4294901760
        %2477 = vmatprep.subr.mxu0 %v2476
        %v2478 = vand.u32 %v290, 4294901760
        %2479 = vmatpush2.msra.mxu0 %v2478
        %v2480 = vand.u32 %v289, 4294901760
        %2481 = vmatprep.subr.mxu0 %v2480
        %v2482 = vand.u32 %v288, 4294901760
        %2483 = vmatpush2.msra.mxu0 %v2482
        %v2484 = vand.u32 %v287, 4294901760
        %2485 = vmatprep.subr.mxu0 %v2484
        %v2486 = vand.u32 %v286, 4294901760
        %2487 = vmatpush2.msra.mxu0 %v2486
        %v2488 = vand.u32 %v285, 4294901760
        %2489 = vmatprep.subr.mxu0 %v2488
        %v2490 = vand.u32 %v284, 4294901760
        %2491 = vmatpush2.msra.mxu0 %v2490
        %v2492 = vand.u32 %v283, 4294901760
        %2493 = vmatprep.subr.mxu0 %v2492
        %v2494 = vand.u32 %v282, 4294901760
        %2495 = vmatpush2.msra.mxu0 %v2494
        %v2496 = vand.u32 %v281, 4294901760
        %2497 = vmatprep.subr.mxu0 %v2496
        %v2498 = vand.u32 %v280, 4294901760
        %2499 = vmatpush2.msra.mxu0 %v2498
        %v2500 = vand.u32 %v279, 4294901760
        %2501 = vmatprep.subr.mxu0 %v2500
        %v2502 = vand.u32 %v278, 4294901760
        %2503 = vmatpush2.msra.mxu0 %v2502
        %v2504 = vand.u32 %v277, 4294901760
        %2505 = vmatprep.subr.mxu0 %v2504
        %v2506 = vand.u32 %v276, 4294901760
        %2507 = vmatpush2.msra.mxu0 %v2506
        %v2508 = vand.u32 %v275, 4294901760
        %2509 = vmatprep.subr.mxu0 %v2508
        %v2510 = vand.u32 %v274, 4294901760
        %2511 = vmatpush2.msra.mxu0 %v2510
        %v2512 = vand.u32 %v273, 4294901760
        %2513 = vmatprep.subr.mxu0 %v2512
        %v2514 = vand.u32 %v272, 4294901760
        %2515 = vmatpush2.msra.mxu0 %v2514
        %v2516 = vand.u32 %v271, 4294901760
        %2517 = vmatprep.subr.mxu0 %v2516
        %v2518 = vand.u32 %v270, 4294901760
        %2519 = vmatpush2.msra.mxu0 %v2518
        %v2520 = vand.u32 %v221, 4294901760
        %v2521 = vsub.f32 %v221, %v2520
        %v2522 = vand.u32 %v2521, 4294901760
        %2523 = vmatprep.mubr.f32.mxu0 %v2522
        %v2524 = vand.u32 %v214, 4294901760
        %v2525 = vsub.f32 %v214, %v2524
        %v2526 = vand.u32 %v2525, 4294901760
        %2527 = vmatmul.mubr.f32.gmra.mxu0 %v2526
        %v2528 = vpop.f32.mrf.mxu0
        %v2529 = vadd.f32 %v2388, %v2528
        %v2530 = vpop.f32.mrf.mxu0
        %v2531 = vadd.f32 %v2390, %v2530
        %2532 = vdwg.mxu0
        %v2533 = vand.u32 %v269, 4294901760
        %v2534 = vsub.f32 %v269, %v2533
        %v2535 = vand.u32 %v2534, 4294901760
        %2536 = vmatprep.subr.mxu0 %v2535
        %v2537 = vand.u32 %v268, 4294901760
        %v2538 = vsub.f32 %v268, %v2537
        %v2539 = vand.u32 %v2538, 4294901760
        %2540 = vmatpush1.msra.mxu0 %v2539
        %v2541 = vand.u32 %v267, 4294901760
        %v2542 = vsub.f32 %v267, %v2541
        %v2543 = vand.u32 %v2542, 4294901760
        %2544 = vmatprep.subr.mxu0 %v2543
        %v2545 = vand.u32 %v266, 4294901760
        %v2546 = vsub.f32 %v266, %v2545
        %v2547 = vand.u32 %v2546, 4294901760
        %2548 = vmatpush1.msra.mxu0 %v2547
        %v2549 = vand.u32 %v265, 4294901760
        %v2550 = vsub.f32 %v265, %v2549
        %v2551 = vand.u32 %v2550, 4294901760
        %2552 = vmatprep.subr.mxu0 %v2551
        %v2553 = vand.u32 %v264, 4294901760
        %v2554 = vsub.f32 %v264, %v2553
        %v2555 = vand.u32 %v2554, 4294901760
        %2556 = vmatpush1.msra.mxu0 %v2555
        %v2557 = vand.u32 %v263, 4294901760
        %v2558 = vsub.f32 %v263, %v2557
        %v2559 = vand.u32 %v2558, 4294901760
        %2560 = vmatprep.subr.mxu0 %v2559
        %v2561 = vand.u32 %v262, 4294901760
        %v2562 = vsub.f32 %v262, %v2561
        %v2563 = vand.u32 %v2562, 4294901760
        %2564 = vmatpush1.msra.mxu0 %v2563
        %v2565 = vand.u32 %v261, 4294901760
        %v2566 = vsub.f32 %v261, %v2565
        %v2567 = vand.u32 %v2566, 4294901760
        %2568 = vmatprep.subr.mxu0 %v2567
        %v2569 = vand.u32 %v260, 4294901760
        %v2570 = vsub.f32 %v260, %v2569
        %v2571 = vand.u32 %v2570, 4294901760
        %2572 = vmatpush1.msra.mxu0 %v2571
        %v2573 = vand.u32 %v259, 4294901760
        %v2574 = vsub.f32 %v259, %v2573
        %v2575 = vand.u32 %v2574, 4294901760
        %2576 = vmatprep.subr.mxu0 %v2575
        %v2577 = vand.u32 %v258, 4294901760
        %v2578 = vsub.f32 %v258, %v2577
        %v2579 = vand.u32 %v2578, 4294901760
        %2580 = vmatpush1.msra.mxu0 %v2579
        %v2581 = vand.u32 %v257, 4294901760
        %v2582 = vsub.f32 %v257, %v2581
        %v2583 = vand.u32 %v2582, 4294901760
        %2584 = vmatprep.subr.mxu0 %v2583
        %v2585 = vand.u32 %v256, 4294901760
        %v2586 = vsub.f32 %v256, %v2585
        %v2587 = vand.u32 %v2586, 4294901760
        %2588 = vmatpush1.msra.mxu0 %v2587
        %v2589 = vand.u32 %v255, 4294901760
        %v2590 = vsub.f32 %v255, %v2589
        %v2591 = vand.u32 %v2590, 4294901760
        %2592 = vmatprep.subr.mxu0 %v2591
        %v2593 = vand.u32 %v254, 4294901760
        %v2594 = vsub.f32 %v254, %v2593
        %v2595 = vand.u32 %v2594, 4294901760
        %2596 = vmatpush1.msra.mxu0 %v2595
        %v2597 = vand.u32 %v253, 4294901760
        %v2598 = vsub.f32 %v253, %v2597
        %v2599 = vand.u32 %v2598, 4294901760
        %2600 = vmatprep.subr.mxu0 %v2599
        %v2601 = vand.u32 %v252, 4294901760
        %v2602 = vsub.f32 %v252, %v2601
        %v2603 = vand.u32 %v2602, 4294901760
        %2604 = vmatpush1.msra.mxu0 %v2603
        %v2605 = vand.u32 %v251, 4294901760
        %v2606 = vsub.f32 %v251, %v2605
        %v2607 = vand.u32 %v2606, 4294901760
        %2608 = vmatprep.subr.mxu0 %v2607
        %v2609 = vand.u32 %v250, 4294901760
        %v2610 = vsub.f32 %v250, %v2609
        %v2611 = vand.u32 %v2610, 4294901760
        %2612 = vmatpush1.msra.mxu0 %v2611
        %v2613 = vand.u32 %v249, 4294901760
        %v2614 = vsub.f32 %v249, %v2613
        %v2615 = vand.u32 %v2614, 4294901760
        %2616 = vmatprep.subr.mxu0 %v2615
        %v2617 = vand.u32 %v248, 4294901760
        %v2618 = vsub.f32 %v248, %v2617
        %v2619 = vand.u32 %v2618, 4294901760
        %2620 = vmatpush1.msra.mxu0 %v2619
        %v2621 = vand.u32 %v247, 4294901760
        %v2622 = vsub.f32 %v247, %v2621
        %v2623 = vand.u32 %v2622, 4294901760
        %2624 = vmatprep.subr.mxu0 %v2623
        %v2625 = vand.u32 %v246, 4294901760
        %v2626 = vsub.f32 %v246, %v2625
        %v2627 = vand.u32 %v2626, 4294901760
        %2628 = vmatpush1.msra.mxu0 %v2627
        %v2629 = vand.u32 %v245, 4294901760
        %v2630 = vsub.f32 %v245, %v2629
        %v2631 = vand.u32 %v2630, 4294901760
        %2632 = vmatprep.subr.mxu0 %v2631
        %v2633 = vand.u32 %v244, 4294901760
        %v2634 = vsub.f32 %v244, %v2633
        %v2635 = vand.u32 %v2634, 4294901760
        %2636 = vmatpush1.msra.mxu0 %v2635
        %v2637 = vand.u32 %v243, 4294901760
        %v2638 = vsub.f32 %v243, %v2637
        %v2639 = vand.u32 %v2638, 4294901760
        %2640 = vmatprep.subr.mxu0 %v2639
        %v2641 = vand.u32 %v242, 4294901760
        %v2642 = vsub.f32 %v242, %v2641
        %v2643 = vand.u32 %v2642, 4294901760
        %2644 = vmatpush1.msra.mxu0 %v2643
        %v2645 = vand.u32 %v241, 4294901760
        %v2646 = vsub.f32 %v241, %v2645
        %v2647 = vand.u32 %v2646, 4294901760
        %2648 = vmatprep.subr.mxu0 %v2647
        %v2649 = vand.u32 %v240, 4294901760
        %v2650 = vsub.f32 %v240, %v2649
        %v2651 = vand.u32 %v2650, 4294901760
        %2652 = vmatpush1.msra.mxu0 %v2651
        %v2653 = vand.u32 %v239, 4294901760
        %v2654 = vsub.f32 %v239, %v2653
        %v2655 = vand.u32 %v2654, 4294901760
        %2656 = vmatprep.subr.mxu0 %v2655
        %v2657 = vand.u32 %v238, 4294901760
        %v2658 = vsub.f32 %v238, %v2657
        %v2659 = vand.u32 %v2658, 4294901760
        %2660 = vmatpush1.msra.mxu0 %v2659
        %v2661 = vand.u32 %v301, 4294901760
        %v2662 = vsub.f32 %v301, %v2661
        %v2663 = vand.u32 %v2662, 4294901760
        %2664 = vmatprep.subr.mxu0 %v2663
        %v2665 = vand.u32 %v300, 4294901760
        %v2666 = vsub.f32 %v300, %v2665
        %v2667 = vand.u32 %v2666, 4294901760
        %2668 = vmatpush2.msra.mxu0 %v2667
        %v2669 = vand.u32 %v299, 4294901760
        %v2670 = vsub.f32 %v299, %v2669
        %v2671 = vand.u32 %v2670, 4294901760
        %2672 = vmatprep.subr.mxu0 %v2671
        %v2673 = vand.u32 %v298, 4294901760
        %v2674 = vsub.f32 %v298, %v2673
        %v2675 = vand.u32 %v2674, 4294901760
        %2676 = vmatpush2.msra.mxu0 %v2675
        %v2677 = vand.u32 %v297, 4294901760
        %v2678 = vsub.f32 %v297, %v2677
        %v2679 = vand.u32 %v2678, 4294901760
        %2680 = vmatprep.subr.mxu0 %v2679
        %v2681 = vand.u32 %v296, 4294901760
        %v2682 = vsub.f32 %v296, %v2681
        %v2683 = vand.u32 %v2682, 4294901760
        %2684 = vmatpush2.msra.mxu0 %v2683
        %v2685 = vand.u32 %v295, 4294901760
        %v2686 = vsub.f32 %v295, %v2685
        %v2687 = vand.u32 %v2686, 4294901760
        %2688 = vmatprep.subr.mxu0 %v2687
        %v2689 = vand.u32 %v294, 4294901760
        %v2690 = vsub.f32 %v294, %v2689
        %v2691 = vand.u32 %v2690, 4294901760
        %2692 = vmatpush2.msra.mxu0 %v2691
        %v2693 = vand.u32 %v293, 4294901760
        %v2694 = vsub.f32 %v293, %v2693
        %v2695 = vand.u32 %v2694, 4294901760
        %2696 = vmatprep.subr.mxu0 %v2695
        %v2697 = vand.u32 %v292, 4294901760
        %v2698 = vsub.f32 %v292, %v2697
        %v2699 = vand.u32 %v2698, 4294901760
        %2700 = vmatpush2.msra.mxu0 %v2699
        %v2701 = vand.u32 %v291, 4294901760
        %v2702 = vsub.f32 %v291, %v2701
        %v2703 = vand.u32 %v2702, 4294901760
        %2704 = vmatprep.subr.mxu0 %v2703
        %v2705 = vand.u32 %v290, 4294901760
        %v2706 = vsub.f32 %v290, %v2705
        %v2707 = vand.u32 %v2706, 4294901760
        %2708 = vmatpush2.msra.mxu0 %v2707
        %v2709 = vand.u32 %v289, 4294901760
        %v2710 = vsub.f32 %v289, %v2709
        %v2711 = vand.u32 %v2710, 4294901760
        %2712 = vmatprep.subr.mxu0 %v2711
        %v2713 = vand.u32 %v288, 4294901760
        %v2714 = vsub.f32 %v288, %v2713
        %v2715 = vand.u32 %v2714, 4294901760
        %2716 = vmatpush2.msra.mxu0 %v2715
        %v2717 = vand.u32 %v287, 4294901760
        %v2718 = vsub.f32 %v287, %v2717
        %v2719 = vand.u32 %v2718, 4294901760
        %2720 = vmatprep.subr.mxu0 %v2719
        %v2721 = vand.u32 %v286, 4294901760
        %v2722 = vsub.f32 %v286, %v2721
        %v2723 = vand.u32 %v2722, 4294901760
        %2724 = vmatpush2.msra.mxu0 %v2723
        %v2725 = vand.u32 %v285, 4294901760
        %v2726 = vsub.f32 %v285, %v2725
        %v2727 = vand.u32 %v2726, 4294901760
        %2728 = vmatprep.subr.mxu0 %v2727
        %v2729 = vand.u32 %v284, 4294901760
        %v2730 = vsub.f32 %v284, %v2729
        %v2731 = vand.u32 %v2730, 4294901760
        %2732 = vmatpush2.msra.mxu0 %v2731
        %v2733 = vand.u32 %v283, 4294901760
        %v2734 = vsub.f32 %v283, %v2733
        %v2735 = vand.u32 %v2734, 4294901760
        %2736 = vmatprep.subr.mxu0 %v2735
        %v2737 = vand.u32 %v282, 4294901760
        %v2738 = vsub.f32 %v282, %v2737
        %v2739 = vand.u32 %v2738, 4294901760
        %2740 = vmatpush2.msra.mxu0 %v2739
        %v2741 = vand.u32 %v281, 4294901760
        %v2742 = vsub.f32 %v281, %v2741
        %v2743 = vand.u32 %v2742, 4294901760
        %2744 = vmatprep.subr.mxu0 %v2743
        %v2745 = vand.u32 %v280, 4294901760
        %v2746 = vsub.f32 %v280, %v2745
        %v2747 = vand.u32 %v2746, 4294901760
        %2748 = vmatpush2.msra.mxu0 %v2747
        %v2749 = vand.u32 %v279, 4294901760
        %v2750 = vsub.f32 %v279, %v2749
        %v2751 = vand.u32 %v2750, 4294901760
        %2752 = vmatprep.subr.mxu0 %v2751
        %v2753 = vand.u32 %v278, 4294901760
        %v2754 = vsub.f32 %v278, %v2753
        %v2755 = vand.u32 %v2754, 4294901760
        %2756 = vmatpush2.msra.mxu0 %v2755
        %v2757 = vand.u32 %v277, 4294901760
        %v2758 = vsub.f32 %v277, %v2757
        %v2759 = vand.u32 %v2758, 4294901760
        %2760 = vmatprep.subr.mxu0 %v2759
        %v2761 = vand.u32 %v276, 4294901760
        %v2762 = vsub.f32 %v276, %v2761
        %v2763 = vand.u32 %v2762, 4294901760
        %2764 = vmatpush2.msra.mxu0 %v2763
        %v2765 = vand.u32 %v275, 4294901760
        %v2766 = vsub.f32 %v275, %v2765
        %v2767 = vand.u32 %v2766, 4294901760
        %2768 = vmatprep.subr.mxu0 %v2767
        %v2769 = vand.u32 %v274, 4294901760
        %v2770 = vsub.f32 %v274, %v2769
        %v2771 = vand.u32 %v2770, 4294901760
        %2772 = vmatpush2.msra.mxu0 %v2771
        %v2773 = vand.u32 %v273, 4294901760
        %v2774 = vsub.f32 %v273, %v2773
        %v2775 = vand.u32 %v2774, 4294901760
        %2776 = vmatprep.subr.mxu0 %v2775
        %v2777 = vand.u32 %v272, 4294901760
        %v2778 = vsub.f32 %v272, %v2777
        %v2779 = vand.u32 %v2778, 4294901760
        %2780 = vmatpush2.msra.mxu0 %v2779
        %v2781 = vand.u32 %v271, 4294901760
        %v2782 = vsub.f32 %v271, %v2781
        %v2783 = vand.u32 %v2782, 4294901760
        %2784 = vmatprep.subr.mxu0 %v2783
        %v2785 = vand.u32 %v270, 4294901760
        %v2786 = vsub.f32 %v270, %v2785
        %v2787 = vand.u32 %v2786, 4294901760
        %2788 = vmatpush2.msra.mxu0 %v2787
        %v2789 = vand.u32 %v221, 4294901760
        %2790 = vmatprep.mubr.f32.mxu0 %v2789
        %v2791 = vand.u32 %v214, 4294901760
        %2792 = vmatmul.mubr.f32.gmra.mxu0 %v2791
        %v2793 = vpop.f32.mrf.mxu0
        %v2794 = vadd.f32 %v2529, %v2793
        %v2795 = vpop.f32.mrf.mxu0
        %v2796 = vadd.f32 %v2531, %v2795
        %2797 = vdwg.mxu0
        %v2798 = vand.u32 %v269, 4294901760
        %2799 = vmatprep.subr.mxu0 %v2798
        %v2800 = vand.u32 %v268, 4294901760
        %2801 = vmatpush1.msra.mxu0 %v2800
        %v2802 = vand.u32 %v267, 4294901760
        %2803 = vmatprep.subr.mxu0 %v2802
        %v2804 = vand.u32 %v266, 4294901760
        %2805 = vmatpush1.msra.mxu0 %v2804
        %v2806 = vand.u32 %v265, 4294901760
        %2807 = vmatprep.subr.mxu0 %v2806
        %v2808 = vand.u32 %v264, 4294901760
        %2809 = vmatpush1.msra.mxu0 %v2808
        %v2810 = vand.u32 %v263, 4294901760
        %2811 = vmatprep.subr.mxu0 %v2810
        %v2812 = vand.u32 %v262, 4294901760
        %2813 = vmatpush1.msra.mxu0 %v2812
        %v2814 = vand.u32 %v261, 4294901760
        %2815 = vmatprep.subr.mxu0 %v2814
        %v2816 = vand.u32 %v260, 4294901760
        %2817 = vmatpush1.msra.mxu0 %v2816
        %v2818 = vand.u32 %v259, 4294901760
        %2819 = vmatprep.subr.mxu0 %v2818
        %v2820 = vand.u32 %v258, 4294901760
        %2821 = vmatpush1.msra.mxu0 %v2820
        %v2822 = vand.u32 %v257, 4294901760
        %2823 = vmatprep.subr.mxu0 %v2822
        %v2824 = vand.u32 %v256, 4294901760
        %2825 = vmatpush1.msra.mxu0 %v2824
        %v2826 = vand.u32 %v255, 4294901760
        %2827 = vmatprep.subr.mxu0 %v2826
        %v2828 = vand.u32 %v254, 4294901760
        %2829 = vmatpush1.msra.mxu0 %v2828
        %v2830 = vand.u32 %v253, 4294901760
        %2831 = vmatprep.subr.mxu0 %v2830
        %v2832 = vand.u32 %v252, 4294901760
        %2833 = vmatpush1.msra.mxu0 %v2832
        %v2834 = vand.u32 %v251, 4294901760
        %2835 = vmatprep.subr.mxu0 %v2834
        %v2836 = vand.u32 %v250, 4294901760
        %2837 = vmatpush1.msra.mxu0 %v2836
        %v2838 = vand.u32 %v249, 4294901760
        %2839 = vmatprep.subr.mxu0 %v2838
        %v2840 = vand.u32 %v248, 4294901760
        %2841 = vmatpush1.msra.mxu0 %v2840
        %v2842 = vand.u32 %v247, 4294901760
        %2843 = vmatprep.subr.mxu0 %v2842
        %v2844 = vand.u32 %v246, 4294901760
        %2845 = vmatpush1.msra.mxu0 %v2844
        %v2846 = vand.u32 %v245, 4294901760
        %2847 = vmatprep.subr.mxu0 %v2846
        %v2848 = vand.u32 %v244, 4294901760
        %2849 = vmatpush1.msra.mxu0 %v2848
        %v2850 = vand.u32 %v243, 4294901760
        %2851 = vmatprep.subr.mxu0 %v2850
        %v2852 = vand.u32 %v242, 4294901760
        %2853 = vmatpush1.msra.mxu0 %v2852
        %v2854 = vand.u32 %v241, 4294901760
        %2855 = vmatprep.subr.mxu0 %v2854
        %v2856 = vand.u32 %v240, 4294901760
        %2857 = vmatpush1.msra.mxu0 %v2856
        %v2858 = vand.u32 %v239, 4294901760
        %2859 = vmatprep.subr.mxu0 %v2858
        %v2860 = vand.u32 %v238, 4294901760
        %2861 = vmatpush1.msra.mxu0 %v2860
        %v2862 = vand.u32 %v301, 4294901760
        %2863 = vmatprep.subr.mxu0 %v2862
        %v2864 = vand.u32 %v300, 4294901760
        %2865 = vmatpush2.msra.mxu0 %v2864
        %v2866 = vand.u32 %v299, 4294901760
        %2867 = vmatprep.subr.mxu0 %v2866
        %v2868 = vand.u32 %v298, 4294901760
        %2869 = vmatpush2.msra.mxu0 %v2868
        %v2870 = vand.u32 %v297, 4294901760
        %2871 = vmatprep.subr.mxu0 %v2870
        %v2872 = vand.u32 %v296, 4294901760
        %2873 = vmatpush2.msra.mxu0 %v2872
        %v2874 = vand.u32 %v295, 4294901760
        %2875 = vmatprep.subr.mxu0 %v2874
        %v2876 = vand.u32 %v294, 4294901760
        %2877 = vmatpush2.msra.mxu0 %v2876
        %v2878 = vand.u32 %v293, 4294901760
        %2879 = vmatprep.subr.mxu0 %v2878
        %v2880 = vand.u32 %v292, 4294901760
        %2881 = vmatpush2.msra.mxu0 %v2880
        %v2882 = vand.u32 %v291, 4294901760
        %2883 = vmatprep.subr.mxu0 %v2882
        %v2884 = vand.u32 %v290, 4294901760
        %2885 = vmatpush2.msra.mxu0 %v2884
        %v2886 = vand.u32 %v289, 4294901760
        %2887 = vmatprep.subr.mxu0 %v2886
        %v2888 = vand.u32 %v288, 4294901760
        %2889 = vmatpush2.msra.mxu0 %v2888
        %v2890 = vand.u32 %v287, 4294901760
        %2891 = vmatprep.subr.mxu0 %v2890
        %v2892 = vand.u32 %v286, 4294901760
        %2893 = vmatpush2.msra.mxu0 %v2892
        %v2894 = vand.u32 %v285, 4294901760
        %2895 = vmatprep.subr.mxu0 %v2894
        %v2896 = vand.u32 %v284, 4294901760
        %2897 = vmatpush2.msra.mxu0 %v2896
        %v2898 = vand.u32 %v283, 4294901760
        %2899 = vmatprep.subr.mxu0 %v2898
        %v2900 = vand.u32 %v282, 4294901760
        %2901 = vmatpush2.msra.mxu0 %v2900
        %v2902 = vand.u32 %v281, 4294901760
        %2903 = vmatprep.subr.mxu0 %v2902
        %v2904 = vand.u32 %v280, 4294901760
        %2905 = vmatpush2.msra.mxu0 %v2904
        %v2906 = vand.u32 %v279, 4294901760
        %2907 = vmatprep.subr.mxu0 %v2906
        %v2908 = vand.u32 %v278, 4294901760
        %2909 = vmatpush2.msra.mxu0 %v2908
        %v2910 = vand.u32 %v277, 4294901760
        %2911 = vmatprep.subr.mxu0 %v2910
        %v2912 = vand.u32 %v276, 4294901760
        %2913 = vmatpush2.msra.mxu0 %v2912
        %v2914 = vand.u32 %v275, 4294901760
        %2915 = vmatprep.subr.mxu0 %v2914
        %v2916 = vand.u32 %v274, 4294901760
        %2917 = vmatpush2.msra.mxu0 %v2916
        %v2918 = vand.u32 %v273, 4294901760
        %2919 = vmatprep.subr.mxu0 %v2918
        %v2920 = vand.u32 %v272, 4294901760
        %2921 = vmatpush2.msra.mxu0 %v2920
        %v2922 = vand.u32 %v271, 4294901760
        %2923 = vmatprep.subr.mxu0 %v2922
        %v2924 = vand.u32 %v270, 4294901760
        %2925 = vmatpush2.msra.mxu0 %v2924
        %v2926 = vand.u32 %v221, 4294901760
        %2927 = vmatprep.mubr.f32.mxu0 %v2926
        %v2928 = vand.u32 %v214, 4294901760
        %2929 = vmatmul.mubr.f32.gmra.mxu0 %v2928
        %v2930 = vpop.f32.mrf.mxu0
        %v2931 = vadd.f32 %v2794, %v2930
        %v2932 = vpop.f32.mrf.mxu0
        %v2933 = vadd.f32 %v2796, %v2932
        %2934 = vdwg.mxu0
        %s2935 = sld [smem:[#allocation2]]
        %v2936 = vstv %s2935
        %v2937 = vadd.f32 %v2931, %v2936
        %v2938 = vadd.f32 %v2933, %v2936
        %v2939 = vxor.u32 %v2937, 2147483648
        %v2940 = vxor.u32 %v2938, 2147483648
        %v2941 = vmul.f32 %v2939, 1.442695
        %v2942 = vpow.pop %v2941
        %v2943 = vmul.f32 %v2940, 1.442695
        %v2944 = vpow.pop %v2943
        %v2945 = vadd.f32 %v2942, 1.0
        %v2946 = vadd.f32 %v2944, 1.0
        %v2947 = vrcp.pop %v2945
        %v2948 = vmul.f32 1.0, %v2947
        %v2949 = vrcp.pop %v2946
        %v2950 = vmul.f32 1.0, %v2949
        %v2953 = vcombine.low %v2948, %v2950
        %v2955 = vunpack.c.l.s4 1966171168
        %v2956 = vunpack.c.0.s8 %v2955
        %v2957 = vlaneseq
        %v2958 = vshrl.u32 %v2957, 7
        %v2959 = vsub.s32 %v2956, %v2958
        %v2960 = vrot.slane %v2953, %v2959
        %v2962 = vunpack.c.l.s4 1966171168
        %v2963 = vunpack.c.0.s8 %v2962
        %v2964 = vlaneseq
        %v2965 = vshrl.u32 %v2964, 7
        %v2966 = vsub.s32 %v2963, %v2965
        %v2967 = vrot.slane %v2960, %v2966
        %v2969 = vlaneseq
        %vm2970 = vcmp.ge.s32.totalorder %v2969, 0
        %vm2971 = vcmp.lt.s32.totalorder %v2969, 256
        %vm2972 = vmand %vm2970, %vm2971
        %2973 = vst.msk [vmem:[%s202] sm:$0x3] %vm2972, %v2967
        %s2974 = sand.u32 %s98, 1
        %s2975 = scalar_lea.sflag [#allocation5], %s2974
        %s2976 = sand.u32 %s98, 1
        %s2977 = smul.addr %s2976, 2
        %s2978 = scalar_lea.vmem [#allocation8], %s2977
        // Predicated region
        $region41: #{tpu_custom_call.1} parent=31 // pred_check
          %p2979 = pneg %p108
        $region42: #{tpu_custom_call.1} parent=31 // pred_check_branch
          %2981 = sbr.rel (%p2979) target = $region44
        $region43: #{tpu_custom_call.1} parent=31 // pred_region
          %s2983 = ssub.s32 32, 32
          %2984 = vsyncadd %s2975, %s2983
          %s2985 = smul.addr %s22, 2
          %s2986 = smul.addr %s2985, 16
          %s2987 = scalar_lea.hbm %s3, %s2986
          %s2989 = sshll.u32 %s2978, 4
          %s2990 = int_to_ptr.vmem [resolvable:$true] %s2989
          %2992 = dma.vmem_to_hbm [thread:$0]  %s2990, 32, %s2987, %s2975
        $region44: #{tpu_custom_call.1} parent=31 // pred_fallthru
          _
      $region32: #{tpu_custom_call.1} parent=5 // pred_fallthru
        _
      %p2993 = scmp.le.s32.totalorder 2, %s17
      // Predicated region
      $region45: #{tpu_custom_call.1} parent=5 // pred_check
        %p2994 = pneg %p2993
      $region46: #{tpu_custom_call.1} parent=5 // pred_check_branch
        %2996 = sbr.rel (%p2994) target = $region48
      $region47: #{tpu_custom_call.1} parent=5 // pred_region
        %s2997 = ssub.s32 %s17, 2
        // Predicated region
        $region49: #{tpu_custom_call.1} parent=47 // pred_check
          %p2998 = pneg %p114
        $region50: #{tpu_custom_call.1} parent=47 // pred_check_branch
          %3000 = sbr.rel (%p2998) target = $region52
        $region51: #{tpu_custom_call.1} parent=47 // pred_region
          %s3001 = sand.u32 %s99, 1
          %s3002 = scalar_lea.sflag [#allocation5], %s3001
          %s3003 = sand.u32 %s99, 1
          %s3004 = smul.addr %s3003, 2
          %s3005 = scalar_lea.vmem [#allocation8], %s3004
          %3006 = dma.done %s3002, 32
        $region52: #{tpu_custom_call.1} parent=47 // pred_fallthru
          _
      $region48: #{tpu_custom_call.1} parent=5 // pred_fallthru
        _
    $region6: #{tpu_custom_call.1} parent=1 // loop_footer
      %s21 = sadd.s32 1, %s17
    $region7: #{tpu_custom_call.1} parent=1 // loop_footer_branch
      %16 = sbr.rel target = $region3
    $region8: #{tpu_custom_call.1} parent=1 // loop_exit
      _
    %3007 = vsyncpa [#allocation4], 1
    %s3008 = scalar_lea.sflag [#allocation4], 1
    %3009 = vsyncpa %s3008, 1
    %3010 = vsyncpa [#allocation7], 1
    %3011 = vsyncpa [#allocation5], 1
    %s3012 = scalar_lea.sflag [#allocation5], 1
    %3013 = vsyncpa %s3012, 1

</llo_original>
